<compile_context>
chip_gen: v7x
topology: tpu7x:2x2x1
jax: 0.10.0
libtpu: 0.0.40
codegen_flags: <defaults>
</compile_context>

<pallas_src>
import functools

import jax
import jax.numpy as jnp
from jax.experimental import pallas as pl
from jax.experimental.pallas import tpu as pltpu

NEG_INF = -1e30  # padded-logit bias; exp underflows to exactly 0 in f32


def _round_up(n, m):
    return ((n + m - 1) // m) * m


def _bf16_act_ok():
    """bf16 VPU exists on v6e / v7x; keep activations f32 on v5e and older."""
    try:
        kind = jax.devices()[0].device_kind.lower()
    except Exception:
        return True
    return not any(t in kind for t in ("v2", "v3", "v4", "v5"))


def mlp_kernel(x_ref, w1_ref, b1_ref, w2_ref, b2_ref, w3_ref, b3_ref, o_ref,
               *, act_dtype):
    # One batch tile per grid step; weights/biases are VMEM-resident across steps.
    x = x_ref[...].astype(jnp.bfloat16)

    # fc1 + LeakyReLU(0.01)  (bf16 MXU, f32 accumulate, activation in act_dtype)
    h1 = (jnp.dot(x, w1_ref[...], preferred_element_type=jnp.float32)
          + b1_ref[...]).astype(act_dtype)
    h1 = jnp.where(h1 >= 0, h1, 0.01 * h1)

    # fc2 + LeakyReLU(0.01)
    h2 = (jnp.dot(h1.astype(jnp.bfloat16), w2_ref[...],
                  preferred_element_type=jnp.float32)
          + b2_ref[...]).astype(act_dtype)
    h2 = jnp.where(h2 >= 0, h2, 0.01 * h2)

    # fc3: keep logits f32 so the -1e30 padded bias stays finite (exp -> exactly 0)
    logits = jnp.dot(h2.astype(jnp.bfloat16), w3_ref[...],
                     preferred_element_type=jnp.float32) + b3_ref[...]

    # Numerically stable softmax over the feature axis; reciprocal on the EUP.
    m = jnp.max(logits, axis=-1, keepdims=True)
    e = jnp.exp(logits - m)
    s = jnp.sum(e, axis=-1, keepdims=True)
    o_ref[...] = (e * pl.reciprocal(s, approx=True)).astype(o_ref.dtype)


def init_params(key, size=3, n_dim=2):
    """PyTorch nn.Linear default init, f32, unpadded."""
    d_in = size ** n_dim            # 9
    d_hid = d_in * 50               # 450
    ks = jax.random.split(key, 6)

    def linear(kw, kb, fan_in, fan_out):
        bound = 1.0 / jnp.sqrt(jnp.float32(fan_in))
        w = jax.random.uniform(kw, (fan_in, fan_out), jnp.float32, -bound, bound)
        b = jax.random.uniform(kb, (1, fan_out), jnp.float32, -bound, bound)
        return w, b

    w1, b1 = linear(ks[0], ks[1], d_in, d_hid)
    w2, b2 = linear(ks[2], ks[3], d_hid, d_hid)
    w3, b3 = linear(ks[4], ks[5], d_hid, d_in)
    return (w1, b1, w2, b2, w3, b3)


def pad_params(w1, b1, w2, b2, w3, b3):
    """Pad hidden 450->512 / output 9->128, cast weights to bf16, biases f32."""
    d_in, d_hid = w1.shape
    d_out = w3.shape[1]
    hp = _round_up(d_hid, 128)      # 512
    np_ = _round_up(d_out, 128)     # 128

    w1p = jnp.zeros((d_in, hp), jnp.bfloat16).at[:, :d_hid].set(w1.astype(jnp.bfloat16))
    b1p = jnp.zeros((1, hp), jnp.float32).at[:, :d_hid].set(b1)
    w2p = jnp.zeros((hp, hp), jnp.bfloat16).at[:d_hid, :d_hid].set(w2.astype(jnp.bfloat16))
    b2p = jnp.zeros((1, hp), jnp.float32).at[:, :d_hid].set(b2)
    w3p = jnp.zeros((hp, np_), jnp.bfloat16).at[:d_hid, :d_out].set(w3.astype(jnp.bfloat16))
    b3p = jnp.full((1, np_), NEG_INF, jnp.float32).at[:, :d_out].set(b3)
    return (w1p, b1p, w2p, b2p, w3p, b3p)


def mlp_forward(x, padded_params, d_out, *, block_m=2048, out_dtype=jnp.bfloat16):
    """x: (B, d_in) f32. Returns softmax probs (B, d_out) f32."""
    w1p, b1p, w2p, b2p, w3p, b3p = padded_params
    B, d_in = x.shape
    n_pad = w3p.shape[1]
    act_dtype = jnp.bfloat16 if _bf16_act_ok() else jnp.float32

    # Batch tiling: as few grid steps as possible (per-step overhead dominates),
    # but prefer exactly 2 steps when cheap so v7x's 2 TensorCores both get work.
    Bp = _round_up(B, 8)
    if Bp <= 2 * block_m and Bp >= 16 and (Bp // 2) % 8 == 0:
        tm = Bp // 2                              # 2 grid steps
    elif Bp <= block_m:
        tm = Bp                                   # single step (tiny batch)
    else:
        tm = block_m                              # large batch: tile by block_m
        Bp = _round_up(Bp, tm)
    if Bp != B:
        x = jnp.pad(x, ((0, Bp - B), (0, 0)))     # at most tm-1 pad rows

    resident = lambda i: (0, 0)   # constant index_map -> no per-step weight DMA
    kern = functools.partial(mlp_kernel, act_dtype=act_dtype)

    out = pl.pallas_call(
        kern,
        out_shape=jax.ShapeDtypeStruct((Bp, n_pad), out_dtype),
        grid_spec=pltpu.PrefetchScalarGridSpec(
            num_scalar_prefetch=0,
            grid=(Bp // tm,),
            in_specs=[
                pl.BlockSpec((tm, d_in), lambda i: (i, 0)),   # x streams per tile
                pl.BlockSpec(w1p.shape, resident),
                pl.BlockSpec(b1p.shape, resident),
                pl.BlockSpec(w2p.shape, resident),
                pl.BlockSpec(b2p.shape, resident),
                pl.BlockSpec(w3p.shape, resident),
                pl.BlockSpec(b3p.shape, resident),
            ],
            out_specs=pl.BlockSpec((tm, n_pad), lambda i: (i, 0)),
        ),
        compiler_params=pltpu.CompilerParams(
            dimension_semantics=("parallel",)),   # batch tiles independent
    )(x, w1p, b1p, w2p, b2p, w3p, b3p)
    # TODO(synk): downstream consumers could read the padded bf16 (Bp,128) block
    # directly (or fuse the argmax) to avoid this slice/cast pass entirely.
    return out[:B, :d_out].astype(jnp.float32)


if __name__ == "__main__":
    key = jax.random.PRNGKey(0)
    k_params, k_x = jax.random.split(key)

    size, n_dim = 3, 2
    d_in = size ** n_dim            # 9
    batch = 64                      # small; Bp=64 -> tm=32, 2 grid steps

    raw = init_params(k_params, size=size, n_dim=n_dim)
    padded = pad_params(*raw)

    # Board-state-like input: values in {-1, 0, 1}, shape (batch, size**n_dim)
    x = jax.random.randint(k_x, (batch, d_in), -1, 2).astype(jnp.float32)

    out = mlp_forward(x, padded, d_out=d_in)
    out = jax.block_until_ready(out)

    # --- references ---
    w1, b1, w2, b2, w3, b3 = raw

    # (a) bf16-weight reference (same weight quantization as the kernel)
    def bf16dot(a, w):
        return jnp.dot(a.astype(jnp.bfloat16), w.astype(jnp.bfloat16),
                       preferred_element_type=jnp.float32)

    h = bf16dot(x, w1) + b1
    h = jnp.where(h >= 0, h, 0.01 * h)
    h = bf16dot(h, w2) + b2
    h = jnp.where(h >= 0, h, 0.01 * h)
    ref_bf16 = jax.nn.softmax(bf16dot(h, w3) + b3, axis=1)

    # (b) full-f32 reference (original PyTorch semantics)
    h = jnp.dot(x, w1) + b1
    h = jnp.where(h >= 0, h, 0.01 * h)
    h = jnp.dot(h, w2) + b2
    h = jnp.where(h >= 0, h, 0.01 * h)
    ref_f32 = jax.nn.softmax(jnp.dot(h, w3) + b3, axis=1)

    assert out.shape == (batch, d_in)
    # tolerances cover bf16 weights/activations/output + approx (EUP) reciprocal
    assert jnp.allclose(out, ref_bf16, atol=2e-2), float(jnp.max(jnp.abs(out - ref_bf16)))
    assert jnp.allclose(out, ref_f32, atol=3e-2), float(jnp.max(jnp.abs(out - ref_f32)))
    assert jnp.allclose(jnp.sum(out, axis=1), 1.0, atol=2e-2)

    print("KERNEL_OK")
</pallas_src>

<mosaic_0001>
module attributes {stable_mosaic.version = 11 : i64} {
  func.func @mlp_kernel(%arg0: i32, %arg1: memref<32x9xf32, #tpu.memory_space<vmem>>, %arg2: memref<9x512xbf16, #tpu.memory_space<vmem>>, %arg3: memref<1x512xf32, #tpu.memory_space<vmem>>, %arg4: memref<512x512xbf16, #tpu.memory_space<vmem>>, %arg5: memref<1x512xf32, #tpu.memory_space<vmem>>, %arg6: memref<512x128xbf16, #tpu.memory_space<vmem>>, %arg7: memref<1x128xf32, #tpu.memory_space<vmem>>, %arg8: memref<32x128xbf16, #tpu.memory_space<vmem>>) attributes {dimension_semantics = [#tpu.dimension_semantics<parallel>], iteration_bounds = array<i64: 2>, scalar_prefetch = 0 : i64, scratch_operands = 0 : i64, tpu.core_type = #tpu.core_type<tc>, window_params = [{transform_indices = @transform_0, window_bounds = array<i64: 32, 9>}, {pipeline_mode = #tpu.pipeline_mode<synchronous>, transform_indices = @transform_1, window_bounds = array<i64: 9, 512>}, {pipeline_mode = #tpu.pipeline_mode<synchronous>, transform_indices = @transform_2, window_bounds = array<i64: 1, 512>}, {pipeline_mode = #tpu.pipeline_mode<synchronous>, transform_indices = @transform_3, window_bounds = array<i64: 512, 512>}, {pipeline_mode = #tpu.pipeline_mode<synchronous>, transform_indices = @transform_4, window_bounds = array<i64: 1, 512>}, {pipeline_mode = #tpu.pipeline_mode<synchronous>, transform_indices = @transform_5, window_bounds = array<i64: 512, 128>}, {pipeline_mode = #tpu.pipeline_mode<synchronous>, transform_indices = @transform_6, window_bounds = array<i64: 1, 128>}, {transform_indices = @transform_7, window_bounds = array<i64: 32, 128>}]} {
    %c0 = arith.constant 0 : index
    %c0_0 = arith.constant 0 : index
    %0 = vector.load %arg1[%c0, %c0_0] : memref<32x9xf32, #tpu.memory_space<vmem>>, vector<32x9xf32>
    %1 = arith.truncf %0 : vector<32x9xf32> to vector<32x9xbf16>
    %c0_1 = arith.constant 0 : index
    %c0_2 = arith.constant 0 : index
    %2 = vector.load %arg2[%c0_1, %c0_2] : memref<9x512xbf16, #tpu.memory_space<vmem>>, vector<9x512xbf16>
    %cst = arith.constant dense<0.000000e+00> : vector<32x512xf32>
    %3 = tpu.matmul %1, %2, %cst {dimension_numbers = #tpu.dot_dimension_numbers<[1], [0], [0], [1], [0, 0, 1, 1], [], []>} : vector<32x9xbf16>, vector<9x512xbf16>, vector<32x512xf32> -> vector<32x512xf32>
    %c0_3 = arith.constant 0 : index
    %c0_4 = arith.constant 0 : index
    %4 = vector.load %arg3[%c0_3, %c0_4] : memref<1x512xf32, #tpu.memory_space<vmem>>, vector<1x512xf32>
    %5 = vector.broadcast %4 : vector<1x512xf32> to vector<32x512xf32>
    %6 = arith.addf %3, %5 : vector<32x512xf32>
    %7 = arith.truncf %6 : vector<32x512xf32> to vector<32x512xbf16>
    %cst_5 = arith.constant 0.000000e+00 : bf16
    %8 = vector.broadcast %cst_5 : bf16 to vector<32x512xbf16>
    %9 = arith.cmpf oge, %7, %8 : vector<32x512xbf16>
    %cst_6 = arith.constant 1.000980e-02 : bf16
    %10 = vector.broadcast %cst_6 : bf16 to vector<32x512xbf16>
    %11 = arith.mulf %10, %7 : vector<32x512xbf16>
    %12 = arith.select %9, %7, %11 : vector<32x512xi1>, vector<32x512xbf16>
    %c0_7 = arith.constant 0 : index
    %c0_8 = arith.constant 0 : index
    %13 = vector.load %arg4[%c0_7, %c0_8] : memref<512x512xbf16, #tpu.memory_space<vmem>>, vector<512x512xbf16>
    %cst_9 = arith.constant dense<0.000000e+00> : vector<32x512xf32>
    %14 = tpu.matmul %12, %13, %cst_9 {dimension_numbers = #tpu.dot_dimension_numbers<[1], [0], [0], [1], [0, 0, 1, 1], [], []>} : vector<32x512xbf16>, vector<512x512xbf16>, vector<32x512xf32> -> vector<32x512xf32>
    %c0_10 = arith.constant 0 : index
    %c0_11 = arith.constant 0 : index
    %15 = vector.load %arg5[%c0_10, %c0_11] : memref<1x512xf32, #tpu.memory_space<vmem>>, vector<1x512xf32>
    %16 = vector.broadcast %15 : vector<1x512xf32> to vector<32x512xf32>
    %17 = arith.addf %14, %16 : vector<32x512xf32>
    %18 = arith.truncf %17 : vector<32x512xf32> to vector<32x512xbf16>
    %cst_12 = arith.constant 0.000000e+00 : bf16
    %19 = vector.broadcast %cst_12 : bf16 to vector<32x512xbf16>
    %20 = arith.cmpf oge, %18, %19 : vector<32x512xbf16>
    %cst_13 = arith.constant 1.000980e-02 : bf16
    %21 = vector.broadcast %cst_13 : bf16 to vector<32x512xbf16>
    %22 = arith.mulf %21, %18 : vector<32x512xbf16>
    %23 = arith.select %20, %18, %22 : vector<32x512xi1>, vector<32x512xbf16>
    %c0_14 = arith.constant 0 : index
    %c0_15 = arith.constant 0 : index
    %24 = vector.load %arg6[%c0_14, %c0_15] : memref<512x128xbf16, #tpu.memory_space<vmem>>, vector<512x128xbf16>
    %cst_16 = arith.constant dense<0.000000e+00> : vector<32x128xf32>
    %25 = tpu.matmul %23, %24, %cst_16 {dimension_numbers = #tpu.dot_dimension_numbers<[1], [0], [0], [1], [0, 0, 1, 1], [], []>} : vector<32x512xbf16>, vector<512x128xbf16>, vector<32x128xf32> -> vector<32x128xf32>
    %c0_17 = arith.constant 0 : index
    %c0_18 = arith.constant 0 : index
    %26 = vector.load %arg7[%c0_17, %c0_18] : memref<1x128xf32, #tpu.memory_space<vmem>>, vector<1x128xf32>
    %27 = vector.broadcast %26 : vector<1x128xf32> to vector<32x128xf32>
    %28 = arith.addf %25, %27 : vector<32x128xf32>
    %cst_19 = arith.constant dense<0xFF800000> : vector<32xf32>
    %29 = vector.multi_reduction <maximumf>, %28, %cst_19 [1] : vector<32x128xf32> to vector<32xf32>
    %30 = vector.shape_cast %29 : vector<32xf32> to vector<32x1xf32>
    %31 = vector.broadcast %30 : vector<32x1xf32> to vector<32x128xf32>
    %32 = arith.subf %28, %31 : vector<32x128xf32>
    %33 = math.exp %32 : vector<32x128xf32>
    %cst_20 = arith.constant dense<0.000000e+00> : vector<32xf32>
    %34 = vector.multi_reduction <add>, %33, %cst_20 [1] : vector<32x128xf32> to vector<32xf32>
    %35 = vector.shape_cast %34 : vector<32xf32> to vector<32x1xf32>
    %36 = tpu.reciprocal %35 {approx = true} : vector<32x1xf32> -> vector<32x1xf32>
    %37 = vector.broadcast %36 : vector<32x1xf32> to vector<32x128xf32>
    %38 = arith.mulf %33, %37 : vector<32x128xf32>
    %39 = arith.truncf %38 : vector<32x128xf32> to vector<32x128xbf16>
    %c0_21 = arith.constant 0 : index
    %c0_22 = arith.constant 0 : index
    %40 = vector.load %arg8[%c0_21, %c0_22] : memref<32x128xbf16, #tpu.memory_space<vmem>>, vector<32x128xbf16>
    tpu.vector_store %arg8[%c0_21, %c0_22], %39 {strides = array<i32>} : memref<32x128xbf16, #tpu.memory_space<vmem>>, vector<32x128xbf16>,
    return
  }
  func.func @transform_0(%arg0: i32) -> (i32, i32) {
    %c0_i32 = arith.constant 0 : i32
    %c0_i32_0 = arith.constant 0 : i32
    return %arg0, %c0_i32 : i32, i32
  }
  func.func @transform_1(%arg0: i32) -> (i32, i32) {
    %c0_i32 = arith.constant 0 : i32
    %c0_i32_0 = arith.constant 0 : i32
    %c0_i32_1 = arith.constant 0 : i32
    return %c0_i32, %c0_i32_0 : i32, i32
  }
  func.func @transform_2(%arg0: i32) -> (i32, i32) {
    %c0_i32 = arith.constant 0 : i32
    %c0_i32_0 = arith.constant 0 : i32
    %c0_i32_1 = arith.constant 0 : i32
    return %c0_i32, %c0_i32_0 : i32, i32
  }
  func.func @transform_3(%arg0: i32) -> (i32, i32) {
    %c0_i32 = arith.constant 0 : i32
    %c0_i32_0 = arith.constant 0 : i32
    %c0_i32_1 = arith.constant 0 : i32
    return %c0_i32, %c0_i32_0 : i32, i32
  }
  func.func @transform_4(%arg0: i32) -> (i32, i32) {
    %c0_i32 = arith.constant 0 : i32
    %c0_i32_0 = arith.constant 0 : i32
    %c0_i32_1 = arith.constant 0 : i32
    return %c0_i32, %c0_i32_0 : i32, i32
  }
  func.func @transform_5(%arg0: i32) -> (i32, i32) {
    %c0_i32 = arith.constant 0 : i32
    %c0_i32_0 = arith.constant 0 : i32
    %c0_i32_1 = arith.constant 0 : i32
    return %c0_i32, %c0_i32_0 : i32, i32
  }
  func.func @transform_6(%arg0: i32) -> (i32, i32) {
    %c0_i32 = arith.constant 0 : i32
    %c0_i32_0 = arith.constant 0 : i32
    %c0_i32_1 = arith.constant 0 : i32
    return %c0_i32, %c0_i32_0 : i32, i32
  }
  func.func @transform_7(%arg0: i32) -> (i32, i32) {
    %c0_i32 = arith.constant 0 : i32
    %c0_i32_0 = arith.constant 0 : i32
    return %arg0, %c0_i32 : i32, i32
  }
}

</mosaic_0001>

<llo_original>
// kernel: tpu_custom_call.1
$region0: #{tpu_custom_call.1}
  #allocation0 [shape = 'u32[]', space=smem, size = 0x4, offset = 0x4, fixed_abs, tag = 'smem constant byte address 0x4 - core index']
  #allocation1 [shape = 'u32[144,128]{1,0:T(1,128)}', space=vmem, size = 0x12000, scoped, tag = 'internal scratch']
  %s0 = inlined_call_operand.vmem [shape: f32[64,9], index: 0, kind: input, shape index: {}]
  %s1 = inlined_call_operand.vmem [shape: bf16[9,512], index: 1, kind: input, shape index: {}]
  %s2 = inlined_call_operand.vmem [shape: f32[1,512], index: 2, kind: input, shape index: {}]
  %s3 = inlined_call_operand.hbm [shape: bf16[512,512], index: 3, kind: input, shape index: {}]
  %s4 = inlined_call_operand.vmem [shape: f32[1,512], index: 4, kind: input, shape index: {}]
  %s5 = inlined_call_operand.hbm [shape: bf16[512,128], index: 5, kind: input, shape index: {}]
  %s6 = inlined_call_operand.vmem [shape: f32[1,128], index: 6, kind: input, shape index: {}]
  %s7 = inlined_call_operand.hbm [shape: bf16[64,128], index: 7, kind: output, shape index: {}]
  %s8 = sld [smem:[#allocation0]]
  $region69: #{tpu_custom_call.1} parent=0
    _
  %s10 = ssub.s32 1, %s8
  %s11 = scalar_select 0, %s10, %s8
  $region1: #{tpu_custom_call.1} parent=0
    #allocation2 [shape = 'u8[524288]{0}', space=vmem, size = 0x80000, scoped, tag = 'input window, operand 3, single buffered']
    #allocation3 [shape = 's32[2]{0}', space=sflag, size = 0x8, scoped, tag = 'scoped memory for tpu_custom_call.1']
    #allocation4 [shape = 's32[2]{0}', space=sflag, size = 0x8, scoped, tag = 'scoped memory for tpu_custom_call.1']
    #allocation5 [shape = 'u8[131072]{0}', space=vmem, size = 0x20000, scoped, tag = 'input window, operand 5, single buffered']
    #allocation6 [shape = 's32[1]{0}', space=sflag, size = 0x4, scoped, tag = 'scoped memory for tpu_custom_call.1']
    #allocation7 [shape = 'u8[16384]{0}', space=vmem, size = 0x4000, scoped, tag = 'output window, operand 0']
    %12 = vsyncpa [#allocation3], 0
    %13 = vsyncpa [#allocation6], 0
    %14 = vsyncpa [#allocation4], 0
    %s15 = scalar_lea.sflag [#allocation4], 1
    %16 = vsyncpa %s15, 0
    loop: start=0, step=1, limit=4
    $region2: #{tpu_custom_call.1} parent=1 // loop_pre_header
      _
    $region3: #{tpu_custom_call.1} parent=1 // loop_header
      %s18 = sphi 0, %s22
      %p19 = scmp.ge.s32.totalorder %s18, 4
      %s28 = sphi 0, %s30
      %s31 = sphi 0, %s28
      %s32 = sphi 0, %s31
      %s48 = sphi 0, %s32
      %s52 = sphi 0, %s52
      %s54 = sphi 0, %s52
      %s55 = sphi 0, %s54
      %s69 = sphi 0, %s55
      %s73 = sphi 0, %s73
      %s75 = sphi 0, %s73
      %s76 = sphi 0, %s75
      %s90 = sphi 0, %s76
      %s94 = sphi 0, %s94
      %s96 = sphi 0, %s94
      %s97 = sphi 0, %s96
      %s111 = sphi 0, %s97
      %s115 = sphi 0, %s115
      %s117 = sphi 0, %s115
      %s118 = sphi 0, %s117
      %s132 = sphi 0, %s118
      %s136 = sphi 0, %s136
      %s138 = sphi 0, %s136
      %s139 = sphi 0, %s138
      %s153 = sphi 0, %s139
      %s157 = sphi 0, %s157
      %s159 = sphi 0, %s157
      %s160 = sphi 0, %s159
      %s174 = sphi 0, %s160
      %s180 = sphi 0, %s182
      %s183 = sphi 0, %s180
      %s184 = sphi 0, %s183
      %s200 = sphi 0, %s184
    $region4: #{tpu_custom_call.1} parent=1 // loop_header_branch
      %21 = sbr.rel (%p19) target = $region8
    $region5: #{tpu_custom_call.1} parent=1 // loop_body
      %s23 = ssub.s32 %s18, 1
      %s24 = ssub.s32 %s18, 2
      %s25 = sadd.s32 %s18, 1
      %s26 = ssub.s32 %s18, %s25
      %p27 = scmp.eq.s32.totalorder %s26, 0
      %s29 = sadd.s32 %s28, 1
      %s30 = scalar_select %p27, %s28, %s29
      %p33 = pneg %p27
      %p34 = scmp.eq.s32.totalorder %s18, 1
      %p35 = por %p33, %p34
      %p36 = scmp.ne.s32.totalorder %s28, %s31
      %p37 = scmp.eq.s32.totalorder %s18, 0
      %p38 = por %p36, %p37
      %p39 = scmp.ne.s32.totalorder %s28, %s31
      %p40 = scmp.eq.s32.totalorder %s23, 1
      %p41 = por %p39, %p40
      %p42 = scmp.ne.s32.totalorder %s31, %s32
      %p43 = scmp.eq.s32.totalorder %s23, 0
      %p44 = por %p42, %p43
      %p45 = scmp.ne.s32.totalorder %s31, %s32
      %p46 = scmp.eq.s32.totalorder %s24, 1
      %p47 = por %p45, %p46
      %p49 = scmp.ne.s32.totalorder %s32, %s48
      %p50 = scmp.eq.s32.totalorder %s24, 0
      %p51 = por %p49, %p50
      %s53 = sadd.s32 %s52, 1
      %p56 = scmp.eq.s32.totalorder %s18, 1
      %p57 = scmp.ne.s32.totalorder %s52, %s54
      %p58 = scmp.eq.s32.totalorder %s18, 0
      %p59 = por %p57, %p58
      %p60 = scmp.ne.s32.totalorder %s52, %s54
      %p61 = scmp.eq.s32.totalorder %s23, 1
      %p62 = por %p60, %p61
      %p63 = scmp.ne.s32.totalorder %s54, %s55
      %p64 = scmp.eq.s32.totalorder %s23, 0
      %p65 = por %p63, %p64
      %p66 = scmp.ne.s32.totalorder %s54, %s55
      %p67 = scmp.eq.s32.totalorder %s24, 1
      %p68 = por %p66, %p67
      %p70 = scmp.ne.s32.totalorder %s55, %s69
      %p71 = scmp.eq.s32.totalorder %s24, 0
      %p72 = por %p70, %p71
      %s74 = sadd.s32 %s73, 1
      %p77 = scmp.eq.s32.totalorder %s18, 1
      %p78 = scmp.ne.s32.totalorder %s73, %s75
      %p79 = scmp.eq.s32.totalorder %s18, 0
      %p80 = por %p78, %p79
      %p81 = scmp.ne.s32.totalorder %s73, %s75
      %p82 = scmp.eq.s32.totalorder %s23, 1
      %p83 = por %p81, %p82
      %p84 = scmp.ne.s32.totalorder %s75, %s76
      %p85 = scmp.eq.s32.totalorder %s23, 0
      %p86 = por %p84, %p85
      %p87 = scmp.ne.s32.totalorder %s75, %s76
      %p88 = scmp.eq.s32.totalorder %s24, 1
      %p89 = por %p87, %p88
      %p91 = scmp.ne.s32.totalorder %s76, %s90
      %p92 = scmp.eq.s32.totalorder %s24, 0
      %p93 = por %p91, %p92
      %s95 = sadd.s32 %s94, 1
      %p98 = scmp.eq.s32.totalorder %s18, 1
      %p99 = scmp.ne.s32.totalorder %s94, %s96
      %p100 = scmp.eq.s32.totalorder %s18, 0
      %p101 = por %p99, %p100
      %p102 = scmp.ne.s32.totalorder %s94, %s96
      %p103 = scmp.eq.s32.totalorder %s23, 1
      %p104 = por %p102, %p103
      %p105 = scmp.ne.s32.totalorder %s96, %s97
      %p106 = scmp.eq.s32.totalorder %s23, 0
      %p107 = por %p105, %p106
      %p108 = scmp.ne.s32.totalorder %s96, %s97
      %p109 = scmp.eq.s32.totalorder %s24, 1
      %p110 = por %p108, %p109
      %p112 = scmp.ne.s32.totalorder %s97, %s111
      %p113 = scmp.eq.s32.totalorder %s24, 0
      %p114 = por %p112, %p113
      %s116 = sadd.s32 %s115, 1
      %p119 = scmp.eq.s32.totalorder %s18, 1
      %p120 = scmp.ne.s32.totalorder %s115, %s117
      %p121 = scmp.eq.s32.totalorder %s18, 0
      %p122 = por %p120, %p121
      %p123 = scmp.ne.s32.totalorder %s115, %s117
      %p124 = scmp.eq.s32.totalorder %s23, 1
      %p125 = por %p123, %p124
      %p126 = scmp.ne.s32.totalorder %s117, %s118
      %p127 = scmp.eq.s32.totalorder %s23, 0
      %p128 = por %p126, %p127
      %p129 = scmp.ne.s32.totalorder %s117, %s118
      %p130 = scmp.eq.s32.totalorder %s24, 1
      %p131 = por %p129, %p130
      %p133 = scmp.ne.s32.totalorder %s118, %s132
      %p134 = scmp.eq.s32.totalorder %s24, 0
      %p135 = por %p133, %p134
      %s137 = sadd.s32 %s136, 1
      %p140 = scmp.eq.s32.totalorder %s18, 1
      %p141 = scmp.ne.s32.totalorder %s136, %s138
      %p142 = scmp.eq.s32.totalorder %s18, 0
      %p143 = por %p141, %p142
      %p144 = scmp.ne.s32.totalorder %s136, %s138
      %p145 = scmp.eq.s32.totalorder %s23, 1
      %p146 = por %p144, %p145
      %p147 = scmp.ne.s32.totalorder %s138, %s139
      %p148 = scmp.eq.s32.totalorder %s23, 0
      %p149 = por %p147, %p148
      %p150 = scmp.ne.s32.totalorder %s138, %s139
      %p151 = scmp.eq.s32.totalorder %s24, 1
      %p152 = por %p150, %p151
      %p154 = scmp.ne.s32.totalorder %s139, %s153
      %p155 = scmp.eq.s32.totalorder %s24, 0
      %p156 = por %p154, %p155
      %s158 = sadd.s32 %s157, 1
      %p161 = scmp.eq.s32.totalorder %s18, 1
      %p162 = scmp.ne.s32.totalorder %s157, %s159
      %p163 = scmp.eq.s32.totalorder %s18, 0
      %p164 = por %p162, %p163
      %p165 = scmp.ne.s32.totalorder %s157, %s159
      %p166 = scmp.eq.s32.totalorder %s23, 1
      %p167 = por %p165, %p166
      %p168 = scmp.ne.s32.totalorder %s159, %s160
      %p169 = scmp.eq.s32.totalorder %s23, 0
      %p170 = por %p168, %p169
      %p171 = scmp.ne.s32.totalorder %s159, %s160
      %p172 = scmp.eq.s32.totalorder %s24, 1
      %p173 = por %p171, %p172
      %p175 = scmp.ne.s32.totalorder %s160, %s174
      %p176 = scmp.eq.s32.totalorder %s24, 0
      %p177 = por %p175, %p176
      %s178 = ssub.s32 %s18, %s25
      %p179 = scmp.eq.s32.totalorder %s178, 0
      %s181 = sadd.s32 %s180, 1
      %s182 = scalar_select %p179, %s180, %s181
      %p185 = pneg %p179
      %p186 = scmp.eq.s32.totalorder %s18, 1
      %p187 = por %p185, %p186
      %p188 = scmp.ne.s32.totalorder %s180, %s183
      %p189 = scmp.eq.s32.totalorder %s18, 0
      %p190 = por %p188, %p189
      %p191 = scmp.ne.s32.totalorder %s180, %s183
      %p192 = scmp.eq.s32.totalorder %s23, 1
      %p193 = por %p191, %p192
      %p194 = scmp.ne.s32.totalorder %s183, %s184
      %p195 = scmp.eq.s32.totalorder %s23, 0
      %p196 = por %p194, %p195
      %p197 = scmp.ne.s32.totalorder %s183, %s184
      %p198 = scmp.eq.s32.totalorder %s24, 1
      %p199 = por %p197, %p198
      %p201 = scmp.ne.s32.totalorder %s184, %s200
      %p202 = scmp.eq.s32.totalorder %s24, 0
      %p203 = por %p201, %p202
      %p204 = scmp.le.s32.totalorder 1, %s18
      %p205 = scmp.lt.s32.totalorder %s18, 3
      %p206 = pnand %p204, %p205
      %p207 = pneg %p206
      // Predicated region
      $region9: #{tpu_custom_call.1} parent=5 // pred_check
        _
      $region10: #{tpu_custom_call.1} parent=5 // pred_check_branch
        %209 = sbr.rel (%p206) target = $region12
      $region11: #{tpu_custom_call.1} parent=5 // pred_region
        %s210 = ssub.s32 %s18, 1
        // Predicated region
        $region13: #{tpu_custom_call.1} parent=11 // pred_check
          %p211 = pneg %p65
        $region14: #{tpu_custom_call.1} parent=11 // pred_check_branch
          %213 = sbr.rel (%p211) target = $region16
        $region15: #{tpu_custom_call.1} parent=11 // pred_region
          _
        $region16: #{tpu_custom_call.1} parent=11 // pred_fallthru
          _
        // Predicated region
        $region17: #{tpu_custom_call.1} parent=11 // pred_check
          %p214 = pneg %p86
        $region18: #{tpu_custom_call.1} parent=11 // pred_check_branch
          %216 = sbr.rel (%p214) target = $region20
        $region19: #{tpu_custom_call.1} parent=11 // pred_region
          _
        $region20: #{tpu_custom_call.1} parent=11 // pred_fallthru
          _
        // Predicated region
        $region21: #{tpu_custom_call.1} parent=11 // pred_check
          %p217 = pneg %p107
        $region22: #{tpu_custom_call.1} parent=11 // pred_check_branch
          %219 = sbr.rel (%p217) target = $region24
        $region23: #{tpu_custom_call.1} parent=11 // pred_region
          %s221 = ssub.s32 16384, 16384
          %222 = vsyncadd [#allocation3], %s221
          %s223 = sshll.u32 [#allocation2], 4
          %s224 = int_to_ptr.vmem [resolvable:$true] %s223
          %229 = dma.hbm_to_vmem [thread:$0]  %s3, 16384, %s224, [#allocation3], 256, 256, 16
        $region24: #{tpu_custom_call.1} parent=11 // pred_fallthru
          _
        // Predicated region
        $region25: #{tpu_custom_call.1} parent=11 // pred_check
          %p230 = pneg %p128
        $region26: #{tpu_custom_call.1} parent=11 // pred_check_branch
          %232 = sbr.rel (%p230) target = $region28
        $region27: #{tpu_custom_call.1} parent=11 // pred_region
          _
        $region28: #{tpu_custom_call.1} parent=11 // pred_fallthru
          _
        // Predicated region
        $region29: #{tpu_custom_call.1} parent=11 // pred_check
          %p233 = pneg %p149
        $region30: #{tpu_custom_call.1} parent=11 // pred_check_branch
          %235 = sbr.rel (%p233) target = $region32
        $region31: #{tpu_custom_call.1} parent=11 // pred_region
          %s237 = ssub.s32 4096, 4096
          %238 = vsyncadd [#allocation6], %s237
          %s239 = sshll.u32 [#allocation5], 4
          %s240 = int_to_ptr.vmem [resolvable:$true] %s239
          %245 = dma.hbm_to_vmem [thread:$0]  %s5, 4096, %s240, [#allocation6], 64, 64, 4
        $region32: #{tpu_custom_call.1} parent=11 // pred_fallthru
          _
        // Predicated region
        $region33: #{tpu_custom_call.1} parent=11 // pred_check
          %p246 = pneg %p170
        $region34: #{tpu_custom_call.1} parent=11 // pred_check_branch
          %248 = sbr.rel (%p246) target = $region36
        $region35: #{tpu_custom_call.1} parent=11 // pred_region
          _
        $region36: #{tpu_custom_call.1} parent=11 // pred_fallthru
          _
      $region12: #{tpu_custom_call.1} parent=5 // pred_fallthru
        _
      %p249 = scmp.lt.s32.totalorder %s18, 2
      // Predicated region
      $region37: #{tpu_custom_call.1} parent=5 // pred_check
        %p250 = pneg %p249
      $region38: #{tpu_custom_call.1} parent=5 // pred_check_branch
        %252 = sbr.rel (%p250) target = $region40
      $region39: #{tpu_custom_call.1} parent=5 // pred_region
        // Predicated region
        $region41: #{tpu_custom_call.1} parent=39 // pred_check
          %p253 = pneg %p38
        $region42: #{tpu_custom_call.1} parent=39 // pred_check_branch
          %255 = sbr.rel (%p253) target = $region44
        $region43: #{tpu_custom_call.1} parent=39 // pred_region
          %s256 = smul.u32 4, %s18
          %p257 = scmp.lt.s32.totalorder %s256, 7
          %s258 = scalar_select %p257, %s256, 7
          %s259 = smul.addr %s258, 8
          %s260 = scalar_lea.vmem %s0, %s259
          %s261 = smul.u32 4, %s18
        $region44: #{tpu_custom_call.1} parent=39 // pred_fallthru
          _
      $region40: #{tpu_custom_call.1} parent=5 // pred_fallthru
        _
      %p262 = scmp.le.s32.totalorder 1, %s18
      %p263 = scmp.lt.s32.totalorder %s18, 3
      %p264 = pnand %p262, %p263
      %p265 = pneg %p264
      // Predicated region
      $region45: #{tpu_custom_call.1} parent=5 // pred_check
        _
      $region46: #{tpu_custom_call.1} parent=5 // pred_check_branch
        %267 = sbr.rel (%p264) target = $region48
      $region47: #{tpu_custom_call.1} parent=5 // pred_region
        %s268 = ssub.s32 %s18, 1
        // Predicated region
        $region49: #{tpu_custom_call.1} parent=47 // pred_check
          %p269 = pneg %p107
        $region50: #{tpu_custom_call.1} parent=47 // pred_check_branch
          %271 = sbr.rel (%p269) target = $region52
        $region51: #{tpu_custom_call.1} parent=47 // pred_region
          %272 = dma.done [#allocation3], 16384
        $region52: #{tpu_custom_call.1} parent=47 // pred_fallthru
          _
        // Predicated region
        $region53: #{tpu_custom_call.1} parent=47 // pred_check
          %p273 = pneg %p149
        $region54: #{tpu_custom_call.1} parent=47 // pred_check_branch
          %275 = sbr.rel (%p273) target = $region56
        $region55: #{tpu_custom_call.1} parent=47 // pred_region
          %276 = dma.done [#allocation6], 4096
        $region56: #{tpu_custom_call.1} parent=47 // pred_fallthru
          _
        %s277 = smul.u32 4, %s23
        %p278 = scmp.lt.s32.totalorder %s277, 7
        %s279 = scalar_select %p278, %s277, 7
        %s280 = smul.addr %s279, 8
        %s281 = scalar_lea.vmem %s0, %s280
        %p282 = pneg %p44
        %p283 = pneg %p41
        %p284 = pneg %p65
        %p285 = pneg %p62
        %p286 = pneg %p86
        %p287 = pneg %p83
        %p288 = pneg %p107
        %p289 = pneg %p104
        %p290 = pneg %p128
        %p291 = pneg %p125
        %p292 = pneg %p149
        %p293 = pneg %p146
        %p294 = pneg %p170
        %p295 = pneg %p167
        %p296 = pneg %p196
        %p297 = pneg %p193
        %s298 = sand.u32 %s183, 1
        %s299 = scalar_lea.sflag [#allocation4], %s298
        %s300 = sand.u32 %s183, 1
        %s301 = smul.addr %s300, 16
        %s302 = scalar_lea.vmem [#allocation7], %s301
        %s303 = smul.u32 4, %s23
        %p304 = scmp.lt.s32.totalorder %s303, 7
        %s305 = scalar_select %p304, %s303, 7
        %s306 = smul.addr %s305, 8
        %s307 = scalar_lea.vmem %s0, %s306
        %s308 = smul.u32 4, %s23
        %s309 = smul.u32 4, %s23
        %v312 = vld [vmem:[%s307] sm:$0xff]
        %v313 = vld [vmem:[%s307 + $0x8] sm:$0xff]
        %v314 = vld [vmem:[%s307 + $0x10] sm:$0xff]
        %v315 = vld [vmem:[%s307 + $0x18] sm:$0xff]
        %v316 = vpack.c.bf16 %v313, %v312
        %v317 = vpack.c.bf16 %v315, %v314
        %v318 = vld [vmem:[%s1] sm:$0xff]
        %v319 = vld [vmem:[%s1 + $0x8] sm:$0xff]
        %v320 = vld [vmem:[%s1 + $0x10] sm:$0x11]
        %v321 = vld [vmem:[%s1 + $0x18] sm:$0x11]
        %v322 = vld [vmem:[%s2] sm:$0xf]
        %v324 = vlaneseq
        %v325 = vshrl.u32 %v324, 7
        %v326 = vsub.s32 0, %v325
        %v327 = vrot.slane %v322, %v326
        %v328 = vlaneseq
        %v329 = vshrl.u32 %v328, 7
        %v330 = vsub.s32 1, %v329
        %v331 = vrot.slane %v322, %v330
        %v332 = vlaneseq
        %v333 = vshrl.u32 %v332, 7
        %v334 = vsub.s32 2, %v333
        %v335 = vrot.slane %v322, %v334
        %v336 = vlaneseq
        %v337 = vshrl.u32 %v336, 7
        %v338 = vsub.s32 3, %v337
        %v339 = vrot.slane %v322, %v338
        %v348 = vunpack.c.l.b16 %v318
        %v349 = vunpack.c.h.b16 %v318
        %v350 = vunpack.c.l.b16 %v319
        %v351 = vunpack.c.h.b16 %v319
        %v352 = vunpack.c.l.b16 %v320
        %v353 = vunpack.c.h.b16 %v320
        %v354 = vunpack.c.l.b16 %v321
        %v355 = vunpack.c.h.b16 %v321
        %v356 = vpack.c.b16 %v352, %v348
        %v357 = vpack.c.b16 %v353, %v349
        %v358 = vpack.c.b16 %v354, %v350
        %v359 = vpack.c.b16 %v355, %v351
        %vm360 = vcmask 72704
        %v362 = vsel %vm360, %v316, 0
        %v365 = vsel %vm360, %v317, 0
        %vm367 = vcmask 1043456
        %vm368 = vcmask 1044480
        %v369 = vsel %vm367, 4294967295, 65535
        %v370 = vsel %vm368, %v369, 0
        %v372 = vand.u32 %v356, %v370
        %v375 = vand.u32 %v357, %v370
        %v378 = vand.u32 %v358, %v370
        %v381 = vand.u32 %v359, %v370
        %383 = vmatprep.subr.bf16.mxu0 %v375
        %384 = vmatpush1.bf16.msra.mxu0 %v372
        %385 = vmatprep.subr.bf16.mxu0 0
        %386 = vmatpush1.bf16.msra.mxu0 0
        %387 = vmatprep.subr.bf16.mxu0 0
        %388 = vmatpush1.bf16.msra.mxu0 0
        %389 = vmatprep.subr.bf16.mxu0 0
        %390 = vmatpush1.bf16.msra.mxu0 0
        %391 = vmatprep.subr.bf16.mxu0 0
        %392 = vmatpush1.bf16.msra.mxu0 0
        %393 = vmatprep.subr.bf16.mxu0 0
        %394 = vmatpush1.bf16.msra.mxu0 0
        %395 = vmatprep.subr.bf16.mxu0 0
        %396 = vmatpush1.bf16.msra.mxu0 0
        %397 = vmatprep.subr.bf16.mxu0 0
        %398 = vmatpush1.bf16.msra.mxu0 0
        %399 = vmatprep.subr.bf16.mxu0 0
        %400 = vmatpush1.bf16.msra.mxu0 0
        %401 = vmatprep.subr.bf16.mxu0 0
        %402 = vmatpush1.bf16.msra.mxu0 0
        %403 = vmatprep.subr.bf16.mxu0 0
        %404 = vmatpush1.bf16.msra.mxu0 0
        %405 = vmatprep.subr.bf16.mxu0 0
        %406 = vmatpush1.bf16.msra.mxu0 0
        %407 = vmatprep.subr.bf16.mxu0 0
        %408 = vmatpush1.bf16.msra.mxu0 0
        %409 = vmatprep.subr.bf16.mxu0 0
        %410 = vmatpush1.bf16.msra.mxu0 0
        %411 = vmatprep.subr.bf16.mxu0 0
        %412 = vmatpush1.bf16.msra.mxu0 0
        %413 = vmatprep.subr.bf16.mxu0 0
        %414 = vmatpush1.bf16.msra.mxu0 0
        %415 = vmatprep.mubr.bf16.mxu0 0
        %416 = vmatmul.mubr.bf16.gmra.mrb[0].mxu0 %v362
        %v417 = vpop.f32.mrb[0].mxu0
        %v418 = vadd.f32 %v327, %v417
        %v419 = vpop.f32.mrb[0].mxu0
        %v420 = vadd.f32 %v331, %v419
        %v421 = vpop.f32.mrb[0].mxu0
        %v422 = vadd.f32 %v327, %v421
        %v423 = vpop.f32.mrb[0].mxu0
        %v424 = vadd.f32 %v331, %v423
        %425 = vmatprep.mubr.bf16.mxu0 0
        %426 = vmatmul.mubr.bf16.gmra.mrb[0].mxu0 %v365
        %v427 = vpop.f32.mrb[0].mxu0
        %v428 = vadd.f32 %v327, %v427
        %v429 = vpop.f32.mrb[0].mxu0
        %v430 = vadd.f32 %v331, %v429
        %v431 = vpop.f32.mrb[0].mxu0
        %v432 = vadd.f32 %v327, %v431
        %v433 = vpop.f32.mrb[0].mxu0
        %v434 = vadd.f32 %v331, %v433
        %435 = vdwg.mxu0
        %436 = vmatprep.subr.bf16.mxu0 %v381
        %437 = vmatpush1.bf16.msra.mxu0 %v378
        %438 = vmatprep.subr.bf16.mxu0 0
        %439 = vmatpush1.bf16.msra.mxu0 0
        %440 = vmatprep.subr.bf16.mxu0 0
        %441 = vmatpush1.bf16.msra.mxu0 0
        %442 = vmatprep.subr.bf16.mxu0 0
        %443 = vmatpush1.bf16.msra.mxu0 0
        %444 = vmatprep.subr.bf16.mxu0 0
        %445 = vmatpush1.bf16.msra.mxu0 0
        %446 = vmatprep.subr.bf16.mxu0 0
        %447 = vmatpush1.bf16.msra.mxu0 0
        %448 = vmatprep.subr.bf16.mxu0 0
        %449 = vmatpush1.bf16.msra.mxu0 0
        %450 = vmatprep.subr.bf16.mxu0 0
        %451 = vmatpush1.bf16.msra.mxu0 0
        %452 = vmatprep.subr.bf16.mxu0 0
        %453 = vmatpush1.bf16.msra.mxu0 0
        %454 = vmatprep.subr.bf16.mxu0 0
        %455 = vmatpush1.bf16.msra.mxu0 0
        %456 = vmatprep.subr.bf16.mxu0 0
        %457 = vmatpush1.bf16.msra.mxu0 0
        %458 = vmatprep.subr.bf16.mxu0 0
        %459 = vmatpush1.bf16.msra.mxu0 0
        %460 = vmatprep.subr.bf16.mxu0 0
        %461 = vmatpush1.bf16.msra.mxu0 0
        %462 = vmatprep.subr.bf16.mxu0 0
        %463 = vmatpush1.bf16.msra.mxu0 0
        %464 = vmatprep.subr.bf16.mxu0 0
        %465 = vmatpush1.bf16.msra.mxu0 0
        %466 = vmatprep.subr.bf16.mxu0 0
        %467 = vmatpush1.bf16.msra.mxu0 0
        %468 = vmatprep.mubr.bf16.mxu0 0
        %469 = vmatmul.mubr.bf16.gmra.mrb[0].mxu0 %v362
        %v470 = vpop.f32.mrb[0].mxu0
        %v471 = vadd.f32 %v335, %v470
        %v472 = vpop.f32.mrb[0].mxu0
        %v473 = vadd.f32 %v339, %v472
        %v474 = vpop.f32.mrb[0].mxu0
        %v475 = vadd.f32 %v335, %v474
        %v476 = vpop.f32.mrb[0].mxu0
        %v477 = vadd.f32 %v339, %v476
        %478 = vmatprep.mubr.bf16.mxu0 0
        %479 = vmatmul.mubr.bf16.gmra.mrb[0].mxu0 %v365
        %v480 = vpop.f32.mrb[0].mxu0
        %v481 = vadd.f32 %v335, %v480
        %v482 = vpop.f32.mrb[0].mxu0
        %v483 = vadd.f32 %v339, %v482
        %v484 = vpop.f32.mrb[0].mxu0
        %v485 = vadd.f32 %v335, %v484
        %v486 = vpop.f32.mrb[0].mxu0
        %v487 = vadd.f32 %v339, %v486
        %488 = vdwg.mxu0
        %v489 = vpack.c.bf16 %v422, %v418
        %v490 = vpack.c.bf16 %v424, %v420
        %v491 = vpack.c.bf16 %v475, %v471
        %v492 = vpack.c.bf16 %v477, %v473
        %v493 = vpack.c.bf16 %v432, %v428
        %v494 = vpack.c.bf16 %v434, %v430
        %v495 = vpack.c.bf16 %v485, %v481
        %v496 = vpack.c.bf16 %v487, %v483
        %vm497 = vcmp.ge.bf16.partialorder %v489, 0
        %vm498 = vcmp.ge.bf16.partialorder %v490, 0
        %vm499 = vcmp.ge.bf16.partialorder %v491, 0
        %vm500 = vcmp.ge.bf16.partialorder %v492, 0
        %vm501 = vcmp.ge.bf16.partialorder %v493, 0
        %vm502 = vcmp.ge.bf16.partialorder %v494, 0
        %vm503 = vcmp.ge.bf16.partialorder %v495, 0
        %vm504 = vcmp.ge.bf16.partialorder %v496, 0
        %v505 = vmul.bf16 %v489, 1009007652
        %v506 = vmul.bf16 %v490, 1009007652
        %v507 = vmul.bf16 %v491, 1009007652
        %v508 = vmul.bf16 %v492, 1009007652
        %v509 = vmul.bf16 %v493, 1009007652
        %v510 = vmul.bf16 %v494, 1009007652
        %v511 = vmul.bf16 %v495, 1009007652
        %v512 = vmul.bf16 %v496, 1009007652
        %v513 = vsel %vm497, %v489, %v505
        %v514 = vsel %vm498, %v490, %v506
        %v515 = vsel %vm499, %v491, %v507
        %v516 = vsel %vm500, %v492, %v508
        %v517 = vsel %vm501, %v493, %v509
        %v518 = vsel %vm502, %v494, %v510
        %v519 = vsel %vm503, %v495, %v511
        %v520 = vsel %vm504, %v496, %v512
        %v521 = vld [vmem:[#allocation2] sm:$0xff]
        %v522 = vld [vmem:[#allocation2 + $0x8] sm:$0xff]
        %v523 = vld [vmem:[#allocation2 + $0x10] sm:$0xff]
        %v524 = vld [vmem:[#allocation2 + $0x18] sm:$0xff]
        %v525 = vld [vmem:[#allocation2 + $0x20] sm:$0xff]
        %v526 = vld [vmem:[#allocation2 + $0x28] sm:$0xff]
        %v527 = vld [vmem:[#allocation2 + $0x30] sm:$0xff]
        %v528 = vld [vmem:[#allocation2 + $0x38] sm:$0xff]
        %v529 = vld [vmem:[#allocation2 + $0x40] sm:$0xff]
        %v530 = vld [vmem:[#allocation2 + $0x48] sm:$0xff]
        %v531 = vld [vmem:[#allocation2 + $0x50] sm:$0xff]
        %v532 = vld [vmem:[#allocation2 + $0x58] sm:$0xff]
        %v533 = vld [vmem:[#allocation2 + $0x60] sm:$0xff]
        %v534 = vld [vmem:[#allocation2 + $0x68] sm:$0xff]
        %v535 = vld [vmem:[#allocation2 + $0x70] sm:$0xff]
        %v536 = vld [vmem:[#allocation2 + $0x78] sm:$0xff]
        %v537 = vld [vmem:[#allocation2 + $0x80] sm:$0xff]
        %v538 = vld [vmem:[#allocation2 + $0x88] sm:$0xff]
        %v539 = vld [vmem:[#allocation2 + $0x90] sm:$0xff]
        %v540 = vld [vmem:[#allocation2 + $0x98] sm:$0xff]
        %v541 = vld [vmem:[#allocation2 + $0xa0] sm:$0xff]
        %v542 = vld [vmem:[#allocation2 + $0xa8] sm:$0xff]
        %v543 = vld [vmem:[#allocation2 + $0xb0] sm:$0xff]
        %v544 = vld [vmem:[#allocation2 + $0xb8] sm:$0xff]
        %v545 = vld [vmem:[#allocation2 + $0xc0] sm:$0xff]
        %v546 = vld [vmem:[#allocation2 + $0xc8] sm:$0xff]
        %v547 = vld [vmem:[#allocation2 + $0xd0] sm:$0xff]
        %v548 = vld [vmem:[#allocation2 + $0xd8] sm:$0xff]
        %v549 = vld [vmem:[#allocation2 + $0xe0] sm:$0xff]
        %v550 = vld [vmem:[#allocation2 + $0xe8] sm:$0xff]
        %v551 = vld [vmem:[#allocation2 + $0xf0] sm:$0xff]
        %v552 = vld [vmem:[#allocation2 + $0xf8] sm:$0xff]
        %v553 = vld [vmem:[#allocation2 + $0x100] sm:$0xff]
        %v554 = vld [vmem:[#allocation2 + $0x108] sm:$0xff]
        %v555 = vld [vmem:[#allocation2 + $0x110] sm:$0xff]
        %v556 = vld [vmem:[#allocation2 + $0x118] sm:$0xff]
        %v557 = vld [vmem:[#allocation2 + $0x120] sm:$0xff]
        %v558 = vld [vmem:[#allocation2 + $0x128] sm:$0xff]
        %v559 = vld [vmem:[#allocation2 + $0x130] sm:$0xff]
        %v560 = vld [vmem:[#allocation2 + $0x138] sm:$0xff]
        %v561 = vld [vmem:[#allocation2 + $0x140] sm:$0xff]
        %v562 = vld [vmem:[#allocation2 + $0x148] sm:$0xff]
        %v563 = vld [vmem:[#allocation2 + $0x150] sm:$0xff]
        %v564 = vld [vmem:[#allocation2 + $0x158] sm:$0xff]
        %v565 = vld [vmem:[#allocation2 + $0x160] sm:$0xff]
        %v566 = vld [vmem:[#allocation2 + $0x168] sm:$0xff]
        %v567 = vld [vmem:[#allocation2 + $0x170] sm:$0xff]
        %v568 = vld [vmem:[#allocation2 + $0x178] sm:$0xff]
        %v569 = vld [vmem:[#allocation2 + $0x180] sm:$0xff]
        %v570 = vld [vmem:[#allocation2 + $0x188] sm:$0xff]
        %v571 = vld [vmem:[#allocation2 + $0x190] sm:$0xff]
        %v572 = vld [vmem:[#allocation2 + $0x198] sm:$0xff]
        %v573 = vld [vmem:[#allocation2 + $0x1a0] sm:$0xff]
        %v574 = vld [vmem:[#allocation2 + $0x1a8] sm:$0xff]
        %v575 = vld [vmem:[#allocation2 + $0x1b0] sm:$0xff]
        %v576 = vld [vmem:[#allocation2 + $0x1b8] sm:$0xff]
        %v577 = vld [vmem:[#allocation2 + $0x1c0] sm:$0xff]
        %v578 = vld [vmem:[#allocation2 + $0x1c8] sm:$0xff]
        %v579 = vld [vmem:[#allocation2 + $0x1d0] sm:$0xff]
        %v580 = vld [vmem:[#allocation2 + $0x1d8] sm:$0xff]
        %v581 = vld [vmem:[#allocation2 + $0x1e0] sm:$0xff]
        %v582 = vld [vmem:[#allocation2 + $0x1e8] sm:$0xff]
        %v583 = vld [vmem:[#allocation2 + $0x1f0] sm:$0xff]
        %v584 = vld [vmem:[#allocation2 + $0x1f8] sm:$0xff]
        %v585 = vld [vmem:[#allocation2 + $0x200] sm:$0xff]
        %v586 = vld [vmem:[#allocation2 + $0x208] sm:$0xff]
        %v587 = vld [vmem:[#allocation2 + $0x210] sm:$0xff]
        %v588 = vld [vmem:[#allocation2 + $0x218] sm:$0xff]
        %v589 = vld [vmem:[#allocation2 + $0x220] sm:$0xff]
        %v590 = vld [vmem:[#allocation2 + $0x228] sm:$0xff]
        %v591 = vld [vmem:[#allocation2 + $0x230] sm:$0xff]
        %v592 = vld [vmem:[#allocation2 + $0x238] sm:$0xff]
        %v593 = vld [vmem:[#allocation2 + $0x240] sm:$0xff]
        %v594 = vld [vmem:[#allocation2 + $0x248] sm:$0xff]
        %v595 = vld [vmem:[#allocation2 + $0x250] sm:$0xff]
        %v596 = vld [vmem:[#allocation2 + $0x258] sm:$0xff]
        %v597 = vld [vmem:[#allocation2 + $0x260] sm:$0xff]
        %v598 = vld [vmem:[#allocation2 + $0x268] sm:$0xff]
        %v599 = vld [vmem:[#allocation2 + $0x270] sm:$0xff]
        %v600 = vld [vmem:[#allocation2 + $0x278] sm:$0xff]
        %v601 = vld [vmem:[#allocation2 + $0x280] sm:$0xff]
        %v602 = vld [vmem:[#allocation2 + $0x288] sm:$0xff]
        %v603 = vld [vmem:[#allocation2 + $0x290] sm:$0xff]
        %v604 = vld [vmem:[#allocation2 + $0x298] sm:$0xff]
        %v605 = vld [vmem:[#allocation2 + $0x2a0] sm:$0xff]
        %v606 = vld [vmem:[#allocation2 + $0x2a8] sm:$0xff]
        %v607 = vld [vmem:[#allocation2 + $0x2b0] sm:$0xff]
        %v608 = vld [vmem:[#allocation2 + $0x2b8] sm:$0xff]
        %v609 = vld [vmem:[#allocation2 + $0x2c0] sm:$0xff]
        %v610 = vld [vmem:[#allocation2 + $0x2c8] sm:$0xff]
        %v611 = vld [vmem:[#allocation2 + $0x2d0] sm:$0xff]
        %v612 = vld [vmem:[#allocation2 + $0x2d8] sm:$0xff]
        %v613 = vld [vmem:[#allocation2 + $0x2e0] sm:$0xff]
        %v614 = vld [vmem:[#allocation2 + $0x2e8] sm:$0xff]
        %v615 = vld [vmem:[#allocation2 + $0x2f0] sm:$0xff]
        %v616 = vld [vmem:[#allocation2 + $0x2f8] sm:$0xff]
        %v617 = vld [vmem:[#allocation2 + $0x300] sm:$0xff]
        %v618 = vld [vmem:[#allocation2 + $0x308] sm:$0xff]
        %v619 = vld [vmem:[#allocation2 + $0x310] sm:$0xff]
        %v620 = vld [vmem:[#allocation2 + $0x318] sm:$0xff]
        %v621 = vld [vmem:[#allocation2 + $0x320] sm:$0xff]
        %v622 = vld [vmem:[#allocation2 + $0x328] sm:$0xff]
        %v623 = vld [vmem:[#allocation2 + $0x330] sm:$0xff]
        %v624 = vld [vmem:[#allocation2 + $0x338] sm:$0xff]
        %v625 = vld [vmem:[#allocation2 + $0x340] sm:$0xff]
        %v626 = vld [vmem:[#allocation2 + $0x348] sm:$0xff]
        %v627 = vld [vmem:[#allocation2 + $0x350] sm:$0xff]
        %v628 = vld [vmem:[#allocation2 + $0x358] sm:$0xff]
        %v629 = vld [vmem:[#allocation2 + $0x360] sm:$0xff]
        %v630 = vld [vmem:[#allocation2 + $0x368] sm:$0xff]
        %v631 = vld [vmem:[#allocation2 + $0x370] sm:$0xff]
        %v632 = vld [vmem:[#allocation2 + $0x378] sm:$0xff]
        %v633 = vld [vmem:[#allocation2 + $0x380] sm:$0xff]
        %v634 = vld [vmem:[#allocation2 + $0x388] sm:$0xff]
        %v635 = vld [vmem:[#allocation2 + $0x390] sm:$0xff]
        %v636 = vld [vmem:[#allocation2 + $0x398] sm:$0xff]
        %v637 = vld [vmem:[#allocation2 + $0x3a0] sm:$0xff]
        %v638 = vld [vmem:[#allocation2 + $0x3a8] sm:$0xff]
        %v639 = vld [vmem:[#allocation2 + $0x3b0] sm:$0xff]
        %v640 = vld [vmem:[#allocation2 + $0x3b8] sm:$0xff]
        %v641 = vld [vmem:[#allocation2 + $0x3c0] sm:$0xff]
        %v642 = vld [vmem:[#allocation2 + $0x3c8] sm:$0xff]
        %v643 = vld [vmem:[#allocation2 + $0x3d0] sm:$0xff]
        %v644 = vld [vmem:[#allocation2 + $0x3d8] sm:$0xff]
        %v645 = vld [vmem:[#allocation2 + $0x3e0] sm:$0xff]
        %v646 = vld [vmem:[#allocation2 + $0x3e8] sm:$0xff]
        %v647 = vld [vmem:[#allocation2 + $0x3f0] sm:$0xff]
        %v648 = vld [vmem:[#allocation2 + $0x3f8] sm:$0xff]
        %v649 = vld [vmem:[%s4] sm:$0xf]
        %v651 = vlaneseq
        %v652 = vshrl.u32 %v651, 7
        %v653 = vsub.s32 0, %v652
        %v654 = vrot.slane %v649, %v653
        %v655 = vlaneseq
        %v656 = vshrl.u32 %v655, 7
        %v657 = vsub.s32 1, %v656
        %v658 = vrot.slane %v649, %v657
        %v659 = vlaneseq
        %v660 = vshrl.u32 %v659, 7
        %v661 = vsub.s32 2, %v660
        %v662 = vrot.slane %v649, %v661
        %v663 = vlaneseq
        %v664 = vshrl.u32 %v663, 7
        %v665 = vsub.s32 3, %v664
        %v666 = vrot.slane %v649, %v665
        %v799 = vunpack.c.l.b16 %v521
        %v800 = vunpack.c.h.b16 %v521
        %v801 = vunpack.c.l.b16 %v522
        %v802 = vunpack.c.h.b16 %v522
        %v803 = vunpack.c.l.b16 %v523
        %v804 = vunpack.c.h.b16 %v523
        %v805 = vunpack.c.l.b16 %v524
        %v806 = vunpack.c.h.b16 %v524
        %v807 = vunpack.c.l.b16 %v525
        %v808 = vunpack.c.h.b16 %v525
        %v809 = vunpack.c.l.b16 %v526
        %v810 = vunpack.c.h.b16 %v526
        %v811 = vunpack.c.l.b16 %v527
        %v812 = vunpack.c.h.b16 %v527
        %v813 = vunpack.c.l.b16 %v528
        %v814 = vunpack.c.h.b16 %v528
        %v815 = vunpack.c.l.b16 %v529
        %v816 = vunpack.c.h.b16 %v529
        %v817 = vunpack.c.l.b16 %v530
        %v818 = vunpack.c.h.b16 %v530
        %v819 = vunpack.c.l.b16 %v531
        %v820 = vunpack.c.h.b16 %v531
        %v821 = vunpack.c.l.b16 %v532
        %v822 = vunpack.c.h.b16 %v532
        %v823 = vunpack.c.l.b16 %v533
        %v824 = vunpack.c.h.b16 %v533
        %v825 = vunpack.c.l.b16 %v534
        %v826 = vunpack.c.h.b16 %v534
        %v827 = vunpack.c.l.b16 %v535
        %v828 = vunpack.c.h.b16 %v535
        %v829 = vunpack.c.l.b16 %v536
        %v830 = vunpack.c.h.b16 %v536
        %v831 = vunpack.c.l.b16 %v537
        %v832 = vunpack.c.h.b16 %v537
        %v833 = vunpack.c.l.b16 %v538
        %v834 = vunpack.c.h.b16 %v538
        %v835 = vunpack.c.l.b16 %v539
        %v836 = vunpack.c.h.b16 %v539
        %v837 = vunpack.c.l.b16 %v540
        %v838 = vunpack.c.h.b16 %v540
        %v839 = vunpack.c.l.b16 %v541
        %v840 = vunpack.c.h.b16 %v541
        %v841 = vunpack.c.l.b16 %v542
        %v842 = vunpack.c.h.b16 %v542
        %v843 = vunpack.c.l.b16 %v543
        %v844 = vunpack.c.h.b16 %v543
        %v845 = vunpack.c.l.b16 %v544
        %v846 = vunpack.c.h.b16 %v544
        %v847 = vunpack.c.l.b16 %v545
        %v848 = vunpack.c.h.b16 %v545
        %v849 = vunpack.c.l.b16 %v546
        %v850 = vunpack.c.h.b16 %v546
        %v851 = vunpack.c.l.b16 %v547
        %v852 = vunpack.c.h.b16 %v547
        %v853 = vunpack.c.l.b16 %v548
        %v854 = vunpack.c.h.b16 %v548
        %v855 = vunpack.c.l.b16 %v549
        %v856 = vunpack.c.h.b16 %v549
        %v857 = vunpack.c.l.b16 %v550
        %v858 = vunpack.c.h.b16 %v550
        %v859 = vunpack.c.l.b16 %v551
        %v860 = vunpack.c.h.b16 %v551
        %v861 = vunpack.c.l.b16 %v552
        %v862 = vunpack.c.h.b16 %v552
        %v863 = vunpack.c.l.b16 %v553
        %v864 = vunpack.c.h.b16 %v553
        %v865 = vunpack.c.l.b16 %v554
        %v866 = vunpack.c.h.b16 %v554
        %v867 = vunpack.c.l.b16 %v555
        %v868 = vunpack.c.h.b16 %v555
        %v869 = vunpack.c.l.b16 %v556
        %v870 = vunpack.c.h.b16 %v556
        %v871 = vunpack.c.l.b16 %v557
        %v872 = vunpack.c.h.b16 %v557
        %v873 = vunpack.c.l.b16 %v558
        %v874 = vunpack.c.h.b16 %v558
        %v875 = vunpack.c.l.b16 %v559
        %v876 = vunpack.c.h.b16 %v559
        %v877 = vunpack.c.l.b16 %v560
        %v878 = vunpack.c.h.b16 %v560
        %v879 = vunpack.c.l.b16 %v561
        %v880 = vunpack.c.h.b16 %v561
        %v881 = vunpack.c.l.b16 %v562
        %v882 = vunpack.c.h.b16 %v562
        %v883 = vunpack.c.l.b16 %v563
        %v884 = vunpack.c.h.b16 %v563
        %v885 = vunpack.c.l.b16 %v564
        %v886 = vunpack.c.h.b16 %v564
        %v887 = vunpack.c.l.b16 %v565
        %v888 = vunpack.c.h.b16 %v565
        %v889 = vunpack.c.l.b16 %v566
        %v890 = vunpack.c.h.b16 %v566
        %v891 = vunpack.c.l.b16 %v567
        %v892 = vunpack.c.h.b16 %v567
        %v893 = vunpack.c.l.b16 %v568
        %v894 = vunpack.c.h.b16 %v568
        %v895 = vunpack.c.l.b16 %v569
        %v896 = vunpack.c.h.b16 %v569
        %v897 = vunpack.c.l.b16 %v570
        %v898 = vunpack.c.h.b16 %v570
        %v899 = vunpack.c.l.b16 %v571
        %v900 = vunpack.c.h.b16 %v571
        %v901 = vunpack.c.l.b16 %v572
        %v902 = vunpack.c.h.b16 %v572
        %v903 = vunpack.c.l.b16 %v573
        %v904 = vunpack.c.h.b16 %v573
        %v905 = vunpack.c.l.b16 %v574
        %v906 = vunpack.c.h.b16 %v574
        %v907 = vunpack.c.l.b16 %v575
        %v908 = vunpack.c.h.b16 %v575
        %v909 = vunpack.c.l.b16 %v576
        %v910 = vunpack.c.h.b16 %v576
        %v911 = vunpack.c.l.b16 %v577
        %v912 = vunpack.c.h.b16 %v577
        %v913 = vunpack.c.l.b16 %v578
        %v914 = vunpack.c.h.b16 %v578
        %v915 = vunpack.c.l.b16 %v579
        %v916 = vunpack.c.h.b16 %v579
        %v917 = vunpack.c.l.b16 %v580
        %v918 = vunpack.c.h.b16 %v580
        %v919 = vunpack.c.l.b16 %v581
        %v920 = vunpack.c.h.b16 %v581
        %v921 = vunpack.c.l.b16 %v582
        %v922 = vunpack.c.h.b16 %v582
        %v923 = vunpack.c.l.b16 %v583
        %v924 = vunpack.c.h.b16 %v583
        %v925 = vunpack.c.l.b16 %v584
        %v926 = vunpack.c.h.b16 %v584
        %v927 = vunpack.c.l.b16 %v585
        %v928 = vunpack.c.h.b16 %v585
        %v929 = vunpack.c.l.b16 %v586
        %v930 = vunpack.c.h.b16 %v586
        %v931 = vunpack.c.l.b16 %v587
        %v932 = vunpack.c.h.b16 %v587
        %v933 = vunpack.c.l.b16 %v588
        %v934 = vunpack.c.h.b16 %v588
        %v935 = vunpack.c.l.b16 %v589
        %v936 = vunpack.c.h.b16 %v589
        %v937 = vunpack.c.l.b16 %v590
        %v938 = vunpack.c.h.b16 %v590
        %v939 = vunpack.c.l.b16 %v591
        %v940 = vunpack.c.h.b16 %v591
        %v941 = vunpack.c.l.b16 %v592
        %v942 = vunpack.c.h.b16 %v592
        %v943 = vunpack.c.l.b16 %v593
        %v944 = vunpack.c.h.b16 %v593
        %v945 = vunpack.c.l.b16 %v594
        %v946 = vunpack.c.h.b16 %v594
        %v947 = vunpack.c.l.b16 %v595
        %v948 = vunpack.c.h.b16 %v595
        %v949 = vunpack.c.l.b16 %v596
        %v950 = vunpack.c.h.b16 %v596
        %v951 = vunpack.c.l.b16 %v597
        %v952 = vunpack.c.h.b16 %v597
        %v953 = vunpack.c.l.b16 %v598
        %v954 = vunpack.c.h.b16 %v598
        %v955 = vunpack.c.l.b16 %v599
        %v956 = vunpack.c.h.b16 %v599
        %v957 = vunpack.c.l.b16 %v600
        %v958 = vunpack.c.h.b16 %v600
        %v959 = vunpack.c.l.b16 %v601
        %v960 = vunpack.c.h.b16 %v601
        %v961 = vunpack.c.l.b16 %v602
        %v962 = vunpack.c.h.b16 %v602
        %v963 = vunpack.c.l.b16 %v603
        %v964 = vunpack.c.h.b16 %v603
        %v965 = vunpack.c.l.b16 %v604
        %v966 = vunpack.c.h.b16 %v604
        %v967 = vunpack.c.l.b16 %v605
        %v968 = vunpack.c.h.b16 %v605
        %v969 = vunpack.c.l.b16 %v606
        %v970 = vunpack.c.h.b16 %v606
        %v971 = vunpack.c.l.b16 %v607
        %v972 = vunpack.c.h.b16 %v607
        %v973 = vunpack.c.l.b16 %v608
        %v974 = vunpack.c.h.b16 %v608
        %v975 = vunpack.c.l.b16 %v609
        %v976 = vunpack.c.h.b16 %v609
        %v977 = vunpack.c.l.b16 %v610
        %v978 = vunpack.c.h.b16 %v610
        %v979 = vunpack.c.l.b16 %v611
        %v980 = vunpack.c.h.b16 %v611
        %v981 = vunpack.c.l.b16 %v612
        %v982 = vunpack.c.h.b16 %v612
        %v983 = vunpack.c.l.b16 %v613
        %v984 = vunpack.c.h.b16 %v613
        %v985 = vunpack.c.l.b16 %v614
        %v986 = vunpack.c.h.b16 %v614
        %v987 = vunpack.c.l.b16 %v615
        %v988 = vunpack.c.h.b16 %v615
        %v989 = vunpack.c.l.b16 %v616
        %v990 = vunpack.c.h.b16 %v616
        %v991 = vunpack.c.l.b16 %v617
        %v992 = vunpack.c.h.b16 %v617
        %v993 = vunpack.c.l.b16 %v618
        %v994 = vunpack.c.h.b16 %v618
        %v995 = vunpack.c.l.b16 %v619
        %v996 = vunpack.c.h.b16 %v619
        %v997 = vunpack.c.l.b16 %v620
        %v998 = vunpack.c.h.b16 %v620
        %v999 = vunpack.c.l.b16 %v621
        %v1000 = vunpack.c.h.b16 %v621
        %v1001 = vunpack.c.l.b16 %v622
        %v1002 = vunpack.c.h.b16 %v622
        %v1003 = vunpack.c.l.b16 %v623
        %v1004 = vunpack.c.h.b16 %v623
        %v1005 = vunpack.c.l.b16 %v624
        %v1006 = vunpack.c.h.b16 %v624
        %v1007 = vunpack.c.l.b16 %v625
        %v1008 = vunpack.c.h.b16 %v625
        %v1009 = vunpack.c.l.b16 %v626
        %v1010 = vunpack.c.h.b16 %v626
        %v1011 = vunpack.c.l.b16 %v627
        %v1012 = vunpack.c.h.b16 %v627
        %v1013 = vunpack.c.l.b16 %v628
        %v1014 = vunpack.c.h.b16 %v628
        %v1015 = vunpack.c.l.b16 %v629
        %v1016 = vunpack.c.h.b16 %v629
        %v1017 = vunpack.c.l.b16 %v630
        %v1018 = vunpack.c.h.b16 %v630
        %v1019 = vunpack.c.l.b16 %v631
        %v1020 = vunpack.c.h.b16 %v631
        %v1021 = vunpack.c.l.b16 %v632
        %v1022 = vunpack.c.h.b16 %v632
        %v1023 = vunpack.c.l.b16 %v633
        %v1024 = vunpack.c.h.b16 %v633
        %v1025 = vunpack.c.l.b16 %v634
        %v1026 = vunpack.c.h.b16 %v634
        %v1027 = vunpack.c.l.b16 %v635
        %v1028 = vunpack.c.h.b16 %v635
        %v1029 = vunpack.c.l.b16 %v636
        %v1030 = vunpack.c.h.b16 %v636
        %v1031 = vunpack.c.l.b16 %v637
        %v1032 = vunpack.c.h.b16 %v637
        %v1033 = vunpack.c.l.b16 %v638
        %v1034 = vunpack.c.h.b16 %v638
        %v1035 = vunpack.c.l.b16 %v639
        %v1036 = vunpack.c.h.b16 %v639
        %v1037 = vunpack.c.l.b16 %v640
        %v1038 = vunpack.c.h.b16 %v640
        %v1039 = vunpack.c.l.b16 %v641
        %v1040 = vunpack.c.h.b16 %v641
        %v1041 = vunpack.c.l.b16 %v642
        %v1042 = vunpack.c.h.b16 %v642
        %v1043 = vunpack.c.l.b16 %v643
        %v1044 = vunpack.c.h.b16 %v643
        %v1045 = vunpack.c.l.b16 %v644
        %v1046 = vunpack.c.h.b16 %v644
        %v1047 = vunpack.c.l.b16 %v645
        %v1048 = vunpack.c.h.b16 %v645
        %v1049 = vunpack.c.l.b16 %v646
        %v1050 = vunpack.c.h.b16 %v646
        %v1051 = vunpack.c.l.b16 %v647
        %v1052 = vunpack.c.h.b16 %v647
        %v1053 = vunpack.c.l.b16 %v648
        %v1054 = vunpack.c.h.b16 %v648
        %v1055 = vpack.c.b16 %v803, %v799
        %v1056 = vpack.c.b16 %v804, %v800
        %v1057 = vpack.c.b16 %v805, %v801
        %v1058 = vpack.c.b16 %v806, %v802
        %v1059 = vpack.c.b16 %v811, %v807
        %v1060 = vpack.c.b16 %v812, %v808
        %v1061 = vpack.c.b16 %v813, %v809
        %v1062 = vpack.c.b16 %v814, %v810
        %v1063 = vpack.c.b16 %v819, %v815
        %v1064 = vpack.c.b16 %v820, %v816
        %v1065 = vpack.c.b16 %v821, %v817
        %v1066 = vpack.c.b16 %v822, %v818
        %v1067 = vpack.c.b16 %v827, %v823
        %v1068 = vpack.c.b16 %v828, %v824
        %v1069 = vpack.c.b16 %v829, %v825
        %v1070 = vpack.c.b16 %v830, %v826
        %v1071 = vpack.c.b16 %v835, %v831
        %v1072 = vpack.c.b16 %v836, %v832
        %v1073 = vpack.c.b16 %v837, %v833
        %v1074 = vpack.c.b16 %v838, %v834
        %v1075 = vpack.c.b16 %v843, %v839
        %v1076 = vpack.c.b16 %v844, %v840
        %v1077 = vpack.c.b16 %v845, %v841
        %v1078 = vpack.c.b16 %v846, %v842
        %v1079 = vpack.c.b16 %v851, %v847
        %v1080 = vpack.c.b16 %v852, %v848
        %v1081 = vpack.c.b16 %v853, %v849
        %v1082 = vpack.c.b16 %v854, %v850
        %v1083 = vpack.c.b16 %v859, %v855
        %v1084 = vpack.c.b16 %v860, %v856
        %v1085 = vpack.c.b16 %v861, %v857
        %v1086 = vpack.c.b16 %v862, %v858
        %v1087 = vpack.c.b16 %v867, %v863
        %v1088 = vpack.c.b16 %v868, %v864
        %v1089 = vpack.c.b16 %v869, %v865
        %v1090 = vpack.c.b16 %v870, %v866
        %v1091 = vpack.c.b16 %v875, %v871
        %v1092 = vpack.c.b16 %v876, %v872
        %v1093 = vpack.c.b16 %v877, %v873
        %v1094 = vpack.c.b16 %v878, %v874
        %v1095 = vpack.c.b16 %v883, %v879
        %v1096 = vpack.c.b16 %v884, %v880
        %v1097 = vpack.c.b16 %v885, %v881
        %v1098 = vpack.c.b16 %v886, %v882
        %v1099 = vpack.c.b16 %v891, %v887
        %v1100 = vpack.c.b16 %v892, %v888
        %v1101 = vpack.c.b16 %v893, %v889
        %v1102 = vpack.c.b16 %v894, %v890
        %v1103 = vpack.c.b16 %v899, %v895
        %v1104 = vpack.c.b16 %v900, %v896
        %v1105 = vpack.c.b16 %v901, %v897
        %v1106 = vpack.c.b16 %v902, %v898
        %v1107 = vpack.c.b16 %v907, %v903
        %v1108 = vpack.c.b16 %v908, %v904
        %v1109 = vpack.c.b16 %v909, %v905
        %v1110 = vpack.c.b16 %v910, %v906
        %v1111 = vpack.c.b16 %v915, %v911
        %v1112 = vpack.c.b16 %v916, %v912
        %v1113 = vpack.c.b16 %v917, %v913
        %v1114 = vpack.c.b16 %v918, %v914
        %v1115 = vpack.c.b16 %v923, %v919
        %v1116 = vpack.c.b16 %v924, %v920
        %v1117 = vpack.c.b16 %v925, %v921
        %v1118 = vpack.c.b16 %v926, %v922
        %v1119 = vpack.c.b16 %v931, %v927
        %v1120 = vpack.c.b16 %v932, %v928
        %v1121 = vpack.c.b16 %v933, %v929
        %v1122 = vpack.c.b16 %v934, %v930
        %v1123 = vpack.c.b16 %v939, %v935
        %v1124 = vpack.c.b16 %v940, %v936
        %v1125 = vpack.c.b16 %v941, %v937
        %v1126 = vpack.c.b16 %v942, %v938
        %v1127 = vpack.c.b16 %v947, %v943
        %v1128 = vpack.c.b16 %v948, %v944
        %v1129 = vpack.c.b16 %v949, %v945
        %v1130 = vpack.c.b16 %v950, %v946
        %v1131 = vpack.c.b16 %v955, %v951
        %v1132 = vpack.c.b16 %v956, %v952
        %v1133 = vpack.c.b16 %v957, %v953
        %v1134 = vpack.c.b16 %v958, %v954
        %v1135 = vpack.c.b16 %v963, %v959
        %v1136 = vpack.c.b16 %v964, %v960
        %v1137 = vpack.c.b16 %v965, %v961
        %v1138 = vpack.c.b16 %v966, %v962
        %v1139 = vpack.c.b16 %v971, %v967
        %v1140 = vpack.c.b16 %v972, %v968
        %v1141 = vpack.c.b16 %v973, %v969
        %v1142 = vpack.c.b16 %v974, %v970
        %v1143 = vpack.c.b16 %v979, %v975
        %v1144 = vpack.c.b16 %v980, %v976
        %v1145 = vpack.c.b16 %v981, %v977
        %v1146 = vpack.c.b16 %v982, %v978
        %v1147 = vpack.c.b16 %v987, %v983
        %v1148 = vpack.c.b16 %v988, %v984
        %v1149 = vpack.c.b16 %v989, %v985
        %v1150 = vpack.c.b16 %v990, %v986
        %v1151 = vpack.c.b16 %v995, %v991
        %v1152 = vpack.c.b16 %v996, %v992
        %v1153 = vpack.c.b16 %v997, %v993
        %v1154 = vpack.c.b16 %v998, %v994
        %v1155 = vpack.c.b16 %v1003, %v999
        %v1156 = vpack.c.b16 %v1004, %v1000
        %v1157 = vpack.c.b16 %v1005, %v1001
        %v1158 = vpack.c.b16 %v1006, %v1002
        %v1159 = vpack.c.b16 %v1011, %v1007
        %v1160 = vpack.c.b16 %v1012, %v1008
        %v1161 = vpack.c.b16 %v1013, %v1009
        %v1162 = vpack.c.b16 %v1014, %v1010
        %v1163 = vpack.c.b16 %v1019, %v1015
        %v1164 = vpack.c.b16 %v1020, %v1016
        %v1165 = vpack.c.b16 %v1021, %v1017
        %v1166 = vpack.c.b16 %v1022, %v1018
        %v1167 = vpack.c.b16 %v1027, %v1023
        %v1168 = vpack.c.b16 %v1028, %v1024
        %v1169 = vpack.c.b16 %v1029, %v1025
        %v1170 = vpack.c.b16 %v1030, %v1026
        %v1171 = vpack.c.b16 %v1035, %v1031
        %v1172 = vpack.c.b16 %v1036, %v1032
        %v1173 = vpack.c.b16 %v1037, %v1033
        %v1174 = vpack.c.b16 %v1038, %v1034
        %v1175 = vpack.c.b16 %v1043, %v1039
        %v1176 = vpack.c.b16 %v1044, %v1040
        %v1177 = vpack.c.b16 %v1045, %v1041
        %v1178 = vpack.c.b16 %v1046, %v1042
        %v1179 = vpack.c.b16 %v1051, %v1047
        %v1180 = vpack.c.b16 %v1052, %v1048
        %v1181 = vpack.c.b16 %v1053, %v1049
        %v1182 = vpack.c.b16 %v1054, %v1050
        %1311 = vmatprep.subr.bf16.mxu0 %v1056
        %1312 = vmatpush1.bf16.msra.mxu0 %v1055
        %1313 = vmatprep.subr.bf16.mxu0 %v1060
        %1314 = vmatpush1.bf16.msra.mxu0 %v1059
        %1315 = vmatprep.subr.bf16.mxu0 %v1064
        %1316 = vmatpush1.bf16.msra.mxu0 %v1063
        %1317 = vmatprep.subr.bf16.mxu0 %v1068
        %1318 = vmatpush1.bf16.msra.mxu0 %v1067
        %1319 = vmatprep.subr.bf16.mxu0 %v1072
        %1320 = vmatpush1.bf16.msra.mxu0 %v1071
        %1321 = vmatprep.subr.bf16.mxu0 %v1076
        %1322 = vmatpush1.bf16.msra.mxu0 %v1075
        %1323 = vmatprep.subr.bf16.mxu0 %v1080
        %1324 = vmatpush1.bf16.msra.mxu0 %v1079
        %1325 = vmatprep.subr.bf16.mxu0 %v1084
        %1326 = vmatpush1.bf16.msra.mxu0 %v1083
        %1327 = vmatprep.subr.bf16.mxu0 %v1088
        %1328 = vmatpush1.bf16.msra.mxu0 %v1087
        %1329 = vmatprep.subr.bf16.mxu0 %v1092
        %1330 = vmatpush1.bf16.msra.mxu0 %v1091
        %1331 = vmatprep.subr.bf16.mxu0 %v1096
        %1332 = vmatpush1.bf16.msra.mxu0 %v1095
        %1333 = vmatprep.subr.bf16.mxu0 %v1100
        %1334 = vmatpush1.bf16.msra.mxu0 %v1099
        %1335 = vmatprep.subr.bf16.mxu0 %v1104
        %1336 = vmatpush1.bf16.msra.mxu0 %v1103
        %1337 = vmatprep.subr.bf16.mxu0 %v1108
        %1338 = vmatpush1.bf16.msra.mxu0 %v1107
        %1339 = vmatprep.subr.bf16.mxu0 %v1112
        %1340 = vmatpush1.bf16.msra.mxu0 %v1111
        %1341 = vmatprep.subr.bf16.mxu0 %v1116
        %1342 = vmatpush1.bf16.msra.mxu0 %v1115
        %1343 = vmatprep.mubr.bf16.mxu0 %v514
        %1344 = vmatmul.mubr.bf16.gmra.mrb[0].mxu0 %v513
        %v1345 = vpop.f32.mrb[0].mxu0
        %v1346 = vadd.f32 %v654, %v1345
        %v1347 = vpop.f32.mrb[0].mxu0
        %v1348 = vadd.f32 %v658, %v1347
        %v1349 = vpop.f32.mrb[0].mxu0
        %v1350 = vadd.f32 %v654, %v1349
        %v1351 = vpop.f32.mrb[0].mxu0
        %v1352 = vadd.f32 %v658, %v1351
        %1353 = vmatprep.mubr.bf16.mxu0 %v518
        %1354 = vmatmul.mubr.bf16.gmra.mrb[0].mxu0 %v517
        %v1355 = vpop.f32.mrb[0].mxu0
        %v1356 = vadd.f32 %v654, %v1355
        %v1357 = vpop.f32.mrb[0].mxu0
        %v1358 = vadd.f32 %v658, %v1357
        %v1359 = vpop.f32.mrb[0].mxu0
        %v1360 = vadd.f32 %v654, %v1359
        %v1361 = vpop.f32.mrb[0].mxu0
        %v1362 = vadd.f32 %v658, %v1361
        %1363 = vdwg.mxu0
        %1364 = vmatprep.subr.bf16.mxu0 %v1120
        %1365 = vmatpush1.bf16.msra.mxu0 %v1119
        %1366 = vmatprep.subr.bf16.mxu0 %v1124
        %1367 = vmatpush1.bf16.msra.mxu0 %v1123
        %1368 = vmatprep.subr.bf16.mxu0 %v1128
        %1369 = vmatpush1.bf16.msra.mxu0 %v1127
        %1370 = vmatprep.subr.bf16.mxu0 %v1132
        %1371 = vmatpush1.bf16.msra.mxu0 %v1131
        %1372 = vmatprep.subr.bf16.mxu0 %v1136
        %1373 = vmatpush1.bf16.msra.mxu0 %v1135
        %1374 = vmatprep.subr.bf16.mxu0 %v1140
        %1375 = vmatpush1.bf16.msra.mxu0 %v1139
        %1376 = vmatprep.subr.bf16.mxu0 %v1144
        %1377 = vmatpush1.bf16.msra.mxu0 %v1143
        %1378 = vmatprep.subr.bf16.mxu0 %v1148
        %1379 = vmatpush1.bf16.msra.mxu0 %v1147
        %1380 = vmatprep.subr.bf16.mxu0 %v1152
        %1381 = vmatpush1.bf16.msra.mxu0 %v1151
        %1382 = vmatprep.subr.bf16.mxu0 %v1156
        %1383 = vmatpush1.bf16.msra.mxu0 %v1155
        %1384 = vmatprep.subr.bf16.mxu0 %v1160
        %1385 = vmatpush1.bf16.msra.mxu0 %v1159
        %1386 = vmatprep.subr.bf16.mxu0 %v1164
        %1387 = vmatpush1.bf16.msra.mxu0 %v1163
        %1388 = vmatprep.subr.bf16.mxu0 %v1168
        %1389 = vmatpush1.bf16.msra.mxu0 %v1167
        %1390 = vmatprep.subr.bf16.mxu0 %v1172
        %1391 = vmatpush1.bf16.msra.mxu0 %v1171
        %1392 = vmatprep.subr.bf16.mxu0 %v1176
        %1393 = vmatpush1.bf16.msra.mxu0 %v1175
        %1394 = vmatprep.subr.bf16.mxu0 %v1180
        %1395 = vmatpush1.bf16.msra.mxu0 %v1179
        %1396 = vmatprep.mubr.bf16.mxu0 %v516
        %1397 = vmatmul.mubr.bf16.gmra.mrb[0].mxu0 %v515
        %v1398 = vpop.f32.mrb[0].mxu0
        %v1399 = vadd.f32 %v1346, %v1398
        %v1400 = vpop.f32.mrb[0].mxu0
        %v1401 = vadd.f32 %v1348, %v1400
        %v1402 = vpop.f32.mrb[0].mxu0
        %v1403 = vadd.f32 %v1350, %v1402
        %v1404 = vpop.f32.mrb[0].mxu0
        %v1405 = vadd.f32 %v1352, %v1404
        %1406 = vmatprep.mubr.bf16.mxu0 %v520
        %1407 = vmatmul.mubr.bf16.gmra.mrb[0].mxu0 %v519
        %v1408 = vpop.f32.mrb[0].mxu0
        %v1409 = vadd.f32 %v1356, %v1408
        %v1410 = vpop.f32.mrb[0].mxu0
        %v1411 = vadd.f32 %v1358, %v1410
        %v1412 = vpop.f32.mrb[0].mxu0
        %v1413 = vadd.f32 %v1360, %v1412
        %v1414 = vpop.f32.mrb[0].mxu0
        %v1415 = vadd.f32 %v1362, %v1414
        %1416 = vdwg.mxu0
        %1417 = vmatprep.subr.bf16.mxu0 %v1058
        %1418 = vmatpush1.bf16.msra.mxu0 %v1057
        %1419 = vmatprep.subr.bf16.mxu0 %v1062
        %1420 = vmatpush1.bf16.msra.mxu0 %v1061
        %1421 = vmatprep.subr.bf16.mxu0 %v1066
        %1422 = vmatpush1.bf16.msra.mxu0 %v1065
        %1423 = vmatprep.subr.bf16.mxu0 %v1070
        %1424 = vmatpush1.bf16.msra.mxu0 %v1069
        %1425 = vmatprep.subr.bf16.mxu0 %v1074
        %1426 = vmatpush1.bf16.msra.mxu0 %v1073
        %1427 = vmatprep.subr.bf16.mxu0 %v1078
        %1428 = vmatpush1.bf16.msra.mxu0 %v1077
        %1429 = vmatprep.subr.bf16.mxu0 %v1082
        %1430 = vmatpush1.bf16.msra.mxu0 %v1081
        %1431 = vmatprep.subr.bf16.mxu0 %v1086
        %1432 = vmatpush1.bf16.msra.mxu0 %v1085
        %1433 = vmatprep.subr.bf16.mxu0 %v1090
        %1434 = vmatpush1.bf16.msra.mxu0 %v1089
        %1435 = vmatprep.subr.bf16.mxu0 %v1094
        %1436 = vmatpush1.bf16.msra.mxu0 %v1093
        %1437 = vmatprep.subr.bf16.mxu0 %v1098
        %1438 = vmatpush1.bf16.msra.mxu0 %v1097
        %1439 = vmatprep.subr.bf16.mxu0 %v1102
        %1440 = vmatpush1.bf16.msra.mxu0 %v1101
        %1441 = vmatprep.subr.bf16.mxu0 %v1106
        %1442 = vmatpush1.bf16.msra.mxu0 %v1105
        %1443 = vmatprep.subr.bf16.mxu0 %v1110
        %1444 = vmatpush1.bf16.msra.mxu0 %v1109
        %1445 = vmatprep.subr.bf16.mxu0 %v1114
        %1446 = vmatpush1.bf16.msra.mxu0 %v1113
        %1447 = vmatprep.subr.bf16.mxu0 %v1118
        %1448 = vmatpush1.bf16.msra.mxu0 %v1117
        %1449 = vmatprep.mubr.bf16.mxu0 %v514
        %1450 = vmatmul.mubr.bf16.gmra.mrb[0].mxu0 %v513
        %v1451 = vpop.f32.mrb[0].mxu0
        %v1452 = vadd.f32 %v662, %v1451
        %v1453 = vpop.f32.mrb[0].mxu0
        %v1454 = vadd.f32 %v666, %v1453
        %v1455 = vpop.f32.mrb[0].mxu0
        %v1456 = vadd.f32 %v662, %v1455
        %v1457 = vpop.f32.mrb[0].mxu0
        %v1458 = vadd.f32 %v666, %v1457
        %1459 = vmatprep.mubr.bf16.mxu0 %v518
        %1460 = vmatmul.mubr.bf16.gmra.mrb[0].mxu0 %v517
        %v1461 = vpop.f32.mrb[0].mxu0
        %v1462 = vadd.f32 %v662, %v1461
        %v1463 = vpop.f32.mrb[0].mxu0
        %v1464 = vadd.f32 %v666, %v1463
        %v1465 = vpop.f32.mrb[0].mxu0
        %v1466 = vadd.f32 %v662, %v1465
        %v1467 = vpop.f32.mrb[0].mxu0
        %v1468 = vadd.f32 %v666, %v1467
        %1469 = vdwg.mxu0
        %1470 = vmatprep.subr.bf16.mxu0 %v1122
        %1471 = vmatpush1.bf16.msra.mxu0 %v1121
        %1472 = vmatprep.subr.bf16.mxu0 %v1126
        %1473 = vmatpush1.bf16.msra.mxu0 %v1125
        %1474 = vmatprep.subr.bf16.mxu0 %v1130
        %1475 = vmatpush1.bf16.msra.mxu0 %v1129
        %1476 = vmatprep.subr.bf16.mxu0 %v1134
        %1477 = vmatpush1.bf16.msra.mxu0 %v1133
        %1478 = vmatprep.subr.bf16.mxu0 %v1138
        %1479 = vmatpush1.bf16.msra.mxu0 %v1137
        %1480 = vmatprep.subr.bf16.mxu0 %v1142
        %1481 = vmatpush1.bf16.msra.mxu0 %v1141
        %1482 = vmatprep.subr.bf16.mxu0 %v1146
        %1483 = vmatpush1.bf16.msra.mxu0 %v1145
        %1484 = vmatprep.subr.bf16.mxu0 %v1150
        %1485 = vmatpush1.bf16.msra.mxu0 %v1149
        %1486 = vmatprep.subr.bf16.mxu0 %v1154
        %1487 = vmatpush1.bf16.msra.mxu0 %v1153
        %1488 = vmatprep.subr.bf16.mxu0 %v1158
        %1489 = vmatpush1.bf16.msra.mxu0 %v1157
        %1490 = vmatprep.subr.bf16.mxu0 %v1162
        %1491 = vmatpush1.bf16.msra.mxu0 %v1161
        %1492 = vmatprep.subr.bf16.mxu0 %v1166
        %1493 = vmatpush1.bf16.msra.mxu0 %v1165
        %1494 = vmatprep.subr.bf16.mxu0 %v1170
        %1495 = vmatpush1.bf16.msra.mxu0 %v1169
        %1496 = vmatprep.subr.bf16.mxu0 %v1174
        %1497 = vmatpush1.bf16.msra.mxu0 %v1173
        %1498 = vmatprep.subr.bf16.mxu0 %v1178
        %1499 = vmatpush1.bf16.msra.mxu0 %v1177
        %1500 = vmatprep.subr.bf16.mxu0 %v1182
        %1501 = vmatpush1.bf16.msra.mxu0 %v1181
        %1502 = vmatprep.mubr.bf16.mxu0 %v516
        %1503 = vmatmul.mubr.bf16.gmra.mrb[0].mxu0 %v515
        %v1504 = vpop.f32.mrb[0].mxu0
        %v1505 = vadd.f32 %v1452, %v1504
        %v1506 = vpop.f32.mrb[0].mxu0
        %v1507 = vadd.f32 %v1454, %v1506
        %v1508 = vpop.f32.mrb[0].mxu0
        %v1509 = vadd.f32 %v1456, %v1508
        %v1510 = vpop.f32.mrb[0].mxu0
        %v1511 = vadd.f32 %v1458, %v1510
        %1512 = vmatprep.mubr.bf16.mxu0 %v520
        %1513 = vmatmul.mubr.bf16.gmra.mrb[0].mxu0 %v519
        %v1514 = vpop.f32.mrb[0].mxu0
        %v1515 = vadd.f32 %v1462, %v1514
        %v1516 = vpop.f32.mrb[0].mxu0
        %v1517 = vadd.f32 %v1464, %v1516
        %v1518 = vpop.f32.mrb[0].mxu0
        %v1519 = vadd.f32 %v1466, %v1518
        %v1520 = vpop.f32.mrb[0].mxu0
        %v1521 = vadd.f32 %v1468, %v1520
        %1522 = vdwg.mxu0
        %v1523 = vpack.c.bf16 %v1403, %v1399
        %v1524 = vpack.c.bf16 %v1405, %v1401
        %v1525 = vpack.c.bf16 %v1509, %v1505
        %v1526 = vpack.c.bf16 %v1511, %v1507
        %v1527 = vpack.c.bf16 %v1413, %v1409
        %v1528 = vpack.c.bf16 %v1415, %v1411
        %v1529 = vpack.c.bf16 %v1519, %v1515
        %v1530 = vpack.c.bf16 %v1521, %v1517
        %vm1531 = vcmp.ge.bf16.partialorder %v1523, 0
        %vm1532 = vcmp.ge.bf16.partialorder %v1524, 0
        %vm1533 = vcmp.ge.bf16.partialorder %v1525, 0
        %vm1534 = vcmp.ge.bf16.partialorder %v1526, 0
        %vm1535 = vcmp.ge.bf16.partialorder %v1527, 0
        %vm1536 = vcmp.ge.bf16.partialorder %v1528, 0
        %vm1537 = vcmp.ge.bf16.partialorder %v1529, 0
        %vm1538 = vcmp.ge.bf16.partialorder %v1530, 0
        %v1539 = vmul.bf16 %v1523, 1009007652
        %v1540 = vmul.bf16 %v1524, 1009007652
        %v1541 = vmul.bf16 %v1525, 1009007652
        %v1542 = vmul.bf16 %v1526, 1009007652
        %v1543 = vmul.bf16 %v1527, 1009007652
        %v1544 = vmul.bf16 %v1528, 1009007652
        %v1545 = vmul.bf16 %v1529, 1009007652
        %v1546 = vmul.bf16 %v1530, 1009007652
        %v1547 = vsel %vm1531, %v1523, %v1539
        %v1548 = vsel %vm1532, %v1524, %v1540
        %v1549 = vsel %vm1533, %v1525, %v1541
        %v1550 = vsel %vm1534, %v1526, %v1542
        %v1551 = vsel %vm1535, %v1527, %v1543
        %v1552 = vsel %vm1536, %v1528, %v1544
        %v1553 = vsel %vm1537, %v1529, %v1545
        %v1554 = vsel %vm1538, %v1530, %v1546
        %v1555 = vld [vmem:[#allocation5] sm:$0xf]
        %v1556 = vld [vmem:[#allocation5 + $0x4] sm:$0xf]
        %v1557 = vld [vmem:[#allocation5 + $0x8] sm:$0xf]
        %v1558 = vld [vmem:[#allocation5 + $0xc] sm:$0xf]
        %v1559 = vld [vmem:[#allocation5 + $0x10] sm:$0xf]
        %v1560 = vld [vmem:[#allocation5 + $0x14] sm:$0xf]
        %v1561 = vld [vmem:[#allocation5 + $0x18] sm:$0xf]
        %v1562 = vld [vmem:[#allocation5 + $0x1c] sm:$0xf]
        %v1563 = vld [vmem:[#allocation5 + $0x20] sm:$0xf]
        %v1564 = vld [vmem:[#allocation5 + $0x24] sm:$0xf]
        %v1565 = vld [vmem:[#allocation5 + $0x28] sm:$0xf]
        %v1566 = vld [vmem:[#allocation5 + $0x2c] sm:$0xf]
        %v1567 = vld [vmem:[#allocation5 + $0x30] sm:$0xf]
        %v1568 = vld [vmem:[#allocation5 + $0x34] sm:$0xf]
        %v1569 = vld [vmem:[#allocation5 + $0x38] sm:$0xf]
        %v1570 = vld [vmem:[#allocation5 + $0x3c] sm:$0xf]
        %v1571 = vld [vmem:[#allocation5 + $0x40] sm:$0xf]
        %v1572 = vld [vmem:[#allocation5 + $0x44] sm:$0xf]
        %v1573 = vld [vmem:[#allocation5 + $0x48] sm:$0xf]
        %v1574 = vld [vmem:[#allocation5 + $0x4c] sm:$0xf]
        %v1575 = vld [vmem:[#allocation5 + $0x50] sm:$0xf]
        %v1576 = vld [vmem:[#allocation5 + $0x54] sm:$0xf]
        %v1577 = vld [vmem:[#allocation5 + $0x58] sm:$0xf]
        %v1578 = vld [vmem:[#allocation5 + $0x5c] sm:$0xf]
        %v1579 = vld [vmem:[#allocation5 + $0x60] sm:$0xf]
        %v1580 = vld [vmem:[#allocation5 + $0x64] sm:$0xf]
        %v1581 = vld [vmem:[#allocation5 + $0x68] sm:$0xf]
        %v1582 = vld [vmem:[#allocation5 + $0x6c] sm:$0xf]
        %v1583 = vld [vmem:[#allocation5 + $0x70] sm:$0xf]
        %v1584 = vld [vmem:[#allocation5 + $0x74] sm:$0xf]
        %v1585 = vld [vmem:[#allocation5 + $0x78] sm:$0xf]
        %v1586 = vld [vmem:[#allocation5 + $0x7c] sm:$0xf]
        %v1587 = vld [vmem:[#allocation5 + $0x80] sm:$0xf]
        %v1588 = vld [vmem:[#allocation5 + $0x84] sm:$0xf]
        %v1589 = vld [vmem:[#allocation5 + $0x88] sm:$0xf]
        %v1590 = vld [vmem:[#allocation5 + $0x8c] sm:$0xf]
        %v1591 = vld [vmem:[#allocation5 + $0x90] sm:$0xf]
        %v1592 = vld [vmem:[#allocation5 + $0x94] sm:$0xf]
        %v1593 = vld [vmem:[#allocation5 + $0x98] sm:$0xf]
        %v1594 = vld [vmem:[#allocation5 + $0x9c] sm:$0xf]
        %v1595 = vld [vmem:[#allocation5 + $0xa0] sm:$0xf]
        %v1596 = vld [vmem:[#allocation5 + $0xa4] sm:$0xf]
        %v1597 = vld [vmem:[#allocation5 + $0xa8] sm:$0xf]
        %v1598 = vld [vmem:[#allocation5 + $0xac] sm:$0xf]
        %v1599 = vld [vmem:[#allocation5 + $0xb0] sm:$0xf]
        %v1600 = vld [vmem:[#allocation5 + $0xb4] sm:$0xf]
        %v1601 = vld [vmem:[#allocation5 + $0xb8] sm:$0xf]
        %v1602 = vld [vmem:[#allocation5 + $0xbc] sm:$0xf]
        %v1603 = vld [vmem:[#allocation5 + $0xc0] sm:$0xf]
        %v1604 = vld [vmem:[#allocation5 + $0xc4] sm:$0xf]
        %v1605 = vld [vmem:[#allocation5 + $0xc8] sm:$0xf]
        %v1606 = vld [vmem:[#allocation5 + $0xcc] sm:$0xf]
        %v1607 = vld [vmem:[#allocation5 + $0xd0] sm:$0xf]
        %v1608 = vld [vmem:[#allocation5 + $0xd4] sm:$0xf]
        %v1609 = vld [vmem:[#allocation5 + $0xd8] sm:$0xf]
        %v1610 = vld [vmem:[#allocation5 + $0xdc] sm:$0xf]
        %v1611 = vld [vmem:[#allocation5 + $0xe0] sm:$0xf]
        %v1612 = vld [vmem:[#allocation5 + $0xe4] sm:$0xf]
        %v1613 = vld [vmem:[#allocation5 + $0xe8] sm:$0xf]
        %v1614 = vld [vmem:[#allocation5 + $0xec] sm:$0xf]
        %v1615 = vld [vmem:[#allocation5 + $0xf0] sm:$0xf]
        %v1616 = vld [vmem:[#allocation5 + $0xf4] sm:$0xf]
        %v1617 = vld [vmem:[#allocation5 + $0xf8] sm:$0xf]
        %v1618 = vld [vmem:[#allocation5 + $0xfc] sm:$0xf]
        %v1619 = vld [vmem:[%s6] sm:$0x1]
        %v1621 = vlaneseq
        %v1622 = vshrl.u32 %v1621, 7
        %v1623 = vsub.s32 0, %v1622
        %v1624 = vrot.slane %v1619, %v1623
        %v1690 = vunpack.c.l.b16 %v1555
        %v1691 = vunpack.c.l.b16 %v1556
        %v1692 = vunpack.c.l.b16 %v1557
        %v1693 = vunpack.c.l.b16 %v1558
        %v1694 = vunpack.c.l.b16 %v1559
        %v1695 = vunpack.c.l.b16 %v1560
        %v1696 = vunpack.c.l.b16 %v1561
        %v1697 = vunpack.c.l.b16 %v1562
        %v1698 = vunpack.c.l.b16 %v1563
        %v1699 = vunpack.c.l.b16 %v1564
        %v1700 = vunpack.c.l.b16 %v1565
        %v1701 = vunpack.c.l.b16 %v1566
        %v1702 = vunpack.c.l.b16 %v1567
        %v1703 = vunpack.c.l.b16 %v1568
        %v1704 = vunpack.c.l.b16 %v1569
        %v1705 = vunpack.c.l.b16 %v1570
        %v1706 = vunpack.c.l.b16 %v1571
        %v1707 = vunpack.c.l.b16 %v1572
        %v1708 = vunpack.c.l.b16 %v1573
        %v1709 = vunpack.c.l.b16 %v1574
        %v1710 = vunpack.c.l.b16 %v1575
        %v1711 = vunpack.c.l.b16 %v1576
        %v1712 = vunpack.c.l.b16 %v1577
        %v1713 = vunpack.c.l.b16 %v1578
        %v1714 = vunpack.c.l.b16 %v1579
        %v1715 = vunpack.c.l.b16 %v1580
        %v1716 = vunpack.c.l.b16 %v1581
        %v1717 = vunpack.c.l.b16 %v1582
        %v1718 = vunpack.c.l.b16 %v1583
        %v1719 = vunpack.c.l.b16 %v1584
        %v1720 = vunpack.c.l.b16 %v1585
        %v1721 = vunpack.c.l.b16 %v1586
        %v1722 = vunpack.c.l.b16 %v1587
        %v1723 = vunpack.c.l.b16 %v1588
        %v1724 = vunpack.c.l.b16 %v1589
        %v1725 = vunpack.c.l.b16 %v1590
        %v1726 = vunpack.c.l.b16 %v1591
        %v1727 = vunpack.c.l.b16 %v1592
        %v1728 = vunpack.c.l.b16 %v1593
        %v1729 = vunpack.c.l.b16 %v1594
        %v1730 = vunpack.c.l.b16 %v1595
        %v1731 = vunpack.c.l.b16 %v1596
        %v1732 = vunpack.c.l.b16 %v1597
        %v1733 = vunpack.c.l.b16 %v1598
        %v1734 = vunpack.c.l.b16 %v1599
        %v1735 = vunpack.c.l.b16 %v1600
        %v1736 = vunpack.c.l.b16 %v1601
        %v1737 = vunpack.c.l.b16 %v1602
        %v1738 = vunpack.c.l.b16 %v1603
        %v1739 = vunpack.c.l.b16 %v1604
        %v1740 = vunpack.c.l.b16 %v1605
        %v1741 = vunpack.c.l.b16 %v1606
        %v1742 = vunpack.c.l.b16 %v1607
        %v1743 = vunpack.c.l.b16 %v1608
        %v1744 = vunpack.c.l.b16 %v1609
        %v1745 = vunpack.c.l.b16 %v1610
        %v1746 = vunpack.c.l.b16 %v1611
        %v1747 = vunpack.c.l.b16 %v1612
        %v1748 = vunpack.c.l.b16 %v1613
        %v1749 = vunpack.c.l.b16 %v1614
        %v1750 = vunpack.c.l.b16 %v1615
        %v1751 = vunpack.c.l.b16 %v1616
        %v1752 = vunpack.c.l.b16 %v1617
        %v1753 = vunpack.c.l.b16 %v1618
        %v1754 = vpack.c.b16 %v1691, %v1690
        %v1755 = vpack.c.b16 %v1693, %v1692
        %v1756 = vpack.c.b16 %v1695, %v1694
        %v1757 = vpack.c.b16 %v1697, %v1696
        %v1758 = vpack.c.b16 %v1699, %v1698
        %v1759 = vpack.c.b16 %v1701, %v1700
        %v1760 = vpack.c.b16 %v1703, %v1702
        %v1761 = vpack.c.b16 %v1705, %v1704
        %v1762 = vpack.c.b16 %v1707, %v1706
        %v1763 = vpack.c.b16 %v1709, %v1708
        %v1764 = vpack.c.b16 %v1711, %v1710
        %v1765 = vpack.c.b16 %v1713, %v1712
        %v1766 = vpack.c.b16 %v1715, %v1714
        %v1767 = vpack.c.b16 %v1717, %v1716
        %v1768 = vpack.c.b16 %v1719, %v1718
        %v1769 = vpack.c.b16 %v1721, %v1720
        %v1770 = vpack.c.b16 %v1723, %v1722
        %v1771 = vpack.c.b16 %v1725, %v1724
        %v1772 = vpack.c.b16 %v1727, %v1726
        %v1773 = vpack.c.b16 %v1729, %v1728
        %v1774 = vpack.c.b16 %v1731, %v1730
        %v1775 = vpack.c.b16 %v1733, %v1732
        %v1776 = vpack.c.b16 %v1735, %v1734
        %v1777 = vpack.c.b16 %v1737, %v1736
        %v1778 = vpack.c.b16 %v1739, %v1738
        %v1779 = vpack.c.b16 %v1741, %v1740
        %v1780 = vpack.c.b16 %v1743, %v1742
        %v1781 = vpack.c.b16 %v1745, %v1744
        %v1782 = vpack.c.b16 %v1747, %v1746
        %v1783 = vpack.c.b16 %v1749, %v1748
        %v1784 = vpack.c.b16 %v1751, %v1750
        %v1785 = vpack.c.b16 %v1753, %v1752
        %1818 = vmatprep.subr.bf16.mxu0 0
        %1819 = vmatpush1.bf16.msra.mxu0 %v1754
        %1820 = vmatprep.subr.bf16.mxu0 0
        %1821 = vmatpush1.bf16.msra.mxu0 %v1755
        %1822 = vmatprep.subr.bf16.mxu0 0
        %1823 = vmatpush1.bf16.msra.mxu0 %v1756
        %1824 = vmatprep.subr.bf16.mxu0 0
        %1825 = vmatpush1.bf16.msra.mxu0 %v1757
        %1826 = vmatprep.subr.bf16.mxu0 0
        %1827 = vmatpush1.bf16.msra.mxu0 %v1758
        %1828 = vmatprep.subr.bf16.mxu0 0
        %1829 = vmatpush1.bf16.msra.mxu0 %v1759
        %1830 = vmatprep.subr.bf16.mxu0 0
        %1831 = vmatpush1.bf16.msra.mxu0 %v1760
        %1832 = vmatprep.subr.bf16.mxu0 0
        %1833 = vmatpush1.bf16.msra.mxu0 %v1761
        %1834 = vmatprep.subr.bf16.mxu0 0
        %1835 = vmatpush1.bf16.msra.mxu0 %v1762
        %1836 = vmatprep.subr.bf16.mxu0 0
        %1837 = vmatpush1.bf16.msra.mxu0 %v1763
        %1838 = vmatprep.subr.bf16.mxu0 0
        %1839 = vmatpush1.bf16.msra.mxu0 %v1764
        %1840 = vmatprep.subr.bf16.mxu0 0
        %1841 = vmatpush1.bf16.msra.mxu0 %v1765
        %1842 = vmatprep.subr.bf16.mxu0 0
        %1843 = vmatpush1.bf16.msra.mxu0 %v1766
        %1844 = vmatprep.subr.bf16.mxu0 0
        %1845 = vmatpush1.bf16.msra.mxu0 %v1767
        %1846 = vmatprep.subr.bf16.mxu0 0
        %1847 = vmatpush1.bf16.msra.mxu0 %v1768
        %1848 = vmatprep.subr.bf16.mxu0 0
        %1849 = vmatpush1.bf16.msra.mxu0 %v1769
        %1850 = vmatprep.mubr.bf16.mxu0 %v1548
        %1851 = vmatmul.mubr.bf16.gmra.mrb[0].mxu0 %v1547
        %v1852 = vpop.f32.mrb[0].mxu0
        %v1853 = vadd.f32 %v1624, %v1852
        %v1854 = vpop.f32.mrb[0].mxu0
        %v1855 = vpop.f32.mrb[0].mxu0
        %v1856 = vadd.f32 %v1624, %v1855
        %v1857 = vpop.f32.mrb[0].mxu0
        %1858 = vmatprep.mubr.bf16.mxu0 %v1552
        %1859 = vmatmul.mubr.bf16.gmra.mrb[0].mxu0 %v1551
        %v1860 = vpop.f32.mrb[0].mxu0
        %v1861 = vadd.f32 %v1624, %v1860
        %v1862 = vpop.f32.mrb[0].mxu0
        %v1863 = vpop.f32.mrb[0].mxu0
        %v1864 = vadd.f32 %v1624, %v1863
        %v1865 = vpop.f32.mrb[0].mxu0
        %1866 = vdwg.mxu0
        %1867 = vmatprep.subr.bf16.mxu0 0
        %1868 = vmatpush1.bf16.msra.mxu0 %v1770
        %1869 = vmatprep.subr.bf16.mxu0 0
        %1870 = vmatpush1.bf16.msra.mxu0 %v1771
        %1871 = vmatprep.subr.bf16.mxu0 0
        %1872 = vmatpush1.bf16.msra.mxu0 %v1772
        %1873 = vmatprep.subr.bf16.mxu0 0
        %1874 = vmatpush1.bf16.msra.mxu0 %v1773
        %1875 = vmatprep.subr.bf16.mxu0 0
        %1876 = vmatpush1.bf16.msra.mxu0 %v1774
        %1877 = vmatprep.subr.bf16.mxu0 0
        %1878 = vmatpush1.bf16.msra.mxu0 %v1775
        %1879 = vmatprep.subr.bf16.mxu0 0
        %1880 = vmatpush1.bf16.msra.mxu0 %v1776
        %1881 = vmatprep.subr.bf16.mxu0 0
        %1882 = vmatpush1.bf16.msra.mxu0 %v1777
        %1883 = vmatprep.subr.bf16.mxu0 0
        %1884 = vmatpush1.bf16.msra.mxu0 %v1778
        %1885 = vmatprep.subr.bf16.mxu0 0
        %1886 = vmatpush1.bf16.msra.mxu0 %v1779
        %1887 = vmatprep.subr.bf16.mxu0 0
        %1888 = vmatpush1.bf16.msra.mxu0 %v1780
        %1889 = vmatprep.subr.bf16.mxu0 0
        %1890 = vmatpush1.bf16.msra.mxu0 %v1781
        %1891 = vmatprep.subr.bf16.mxu0 0
        %1892 = vmatpush1.bf16.msra.mxu0 %v1782
        %1893 = vmatprep.subr.bf16.mxu0 0
        %1894 = vmatpush1.bf16.msra.mxu0 %v1783
        %1895 = vmatprep.subr.bf16.mxu0 0
        %1896 = vmatpush1.bf16.msra.mxu0 %v1784
        %1897 = vmatprep.subr.bf16.mxu0 0
        %1898 = vmatpush1.bf16.msra.mxu0 %v1785
        %1899 = vmatprep.mubr.bf16.mxu0 %v1550
        %1900 = vmatmul.mubr.bf16.gmra.mrb[0].mxu0 %v1549
        %v1901 = vpop.f32.mrb[0].mxu0
        %v1902 = vadd.f32 %v1853, %v1901
        %v1903 = vpop.f32.mrb[0].mxu0
        %v1904 = vpop.f32.mrb[0].mxu0
        %v1905 = vadd.f32 %v1856, %v1904
        %v1906 = vpop.f32.mrb[0].mxu0
        %1907 = vmatprep.mubr.bf16.mxu0 %v1554
        %1908 = vmatmul.mubr.bf16.gmra.mrb[0].mxu0 %v1553
        %v1909 = vpop.f32.mrb[0].mxu0
        %v1910 = vadd.f32 %v1861, %v1909
        %v1911 = vpop.f32.mrb[0].mxu0
        %v1912 = vpop.f32.mrb[0].mxu0
        %v1913 = vadd.f32 %v1864, %v1912
        %v1914 = vpop.f32.mrb[0].mxu0
        %1915 = vdwg.mxu0
        %1916 = vmax.xlane.f32.xlu0 %v1902
        %v1917 = vpop.xlane.xlu0 %1916
        %1918 = vmax.xlane.f32.xlu0 %v1905
        %v1919 = vpop.xlane.xlu0 %1918
        %1920 = vmax.xlane.f32.xlu0 %v1910
        %v1921 = vpop.xlane.xlu0 %1920
        %1922 = vmax.xlane.f32.xlu0 %v1913
        %v1923 = vpop.xlane.xlu0 %1922
        %v1924 = vsub.f32 %v1902, %v1917
        %v1925 = vsub.f32 %v1905, %v1919
        %v1926 = vsub.f32 %v1910, %v1921
        %v1927 = vsub.f32 %v1913, %v1923
        %v1928 = vmul.f32 %v1924, 1.442695
        %v1929 = vpow.pop %v1928
        %v1930 = vmul.f32 %v1925, 1.442695
        %v1931 = vpow.pop %v1930
        %v1932 = vmul.f32 %v1926, 1.442695
        %v1933 = vpow.pop %v1932
        %v1934 = vmul.f32 %v1927, 1.442695
        %v1935 = vpow.pop %v1934
        %1936 = vadd.xlane.f32.xlu0 %v1929
        %v1937 = vpop.xlane.xlu0 %1936
        %1938 = vadd.xlane.f32.xlu0 %v1931
        %v1939 = vpop.xlane.xlu0 %1938
        %1940 = vadd.xlane.f32.xlu0 %v1933
        %v1941 = vpop.xlane.xlu0 %1940
        %1942 = vadd.xlane.f32.xlu0 %v1935
        %v1943 = vpop.xlane.xlu0 %1942
        %v1944 = vrcp.pop %v1937
        %v1945 = vrcp.pop %v1939
        %v1946 = vrcp.pop %v1941
        %v1947 = vrcp.pop %v1943
        %v1948 = vmul.f32 %v1929, %v1944
        %v1949 = vmul.f32 %v1931, %v1945
        %v1950 = vmul.f32 %v1933, %v1946
        %v1951 = vmul.f32 %v1935, %v1947
        %v1952 = vpack.c.bf16 %v1949, %v1948
        %v1953 = vpack.c.bf16 %v1951, %v1950
        %v1956 = vunpack.c.l.b16 %v1952
        %v1957 = vunpack.c.h.b16 %v1952
        %v1958 = vunpack.c.l.b16 %v1953
        %v1959 = vunpack.c.h.b16 %v1953
        %v1960 = vpack.c.b16 %v1956, %v1956
        %v1961 = vpack.c.b16 %v1957, %v1957
        %v1962 = vpack.c.b16 %v1958, %v1958
        %v1963 = vpack.c.b16 %v1959, %v1959
        %1968 = vst [vmem:[%s302] sm:$0xf] %v1960
        %1969 = vst [vmem:[%s302 + $0x4] sm:$0xf] %v1961
        %1970 = vst [vmem:[%s302 + $0x8] sm:$0xf] %v1962
        %1971 = vst [vmem:[%s302 + $0xc] sm:$0xf] %v1963
        %s1972 = sand.u32 %s183, 1
        %s1973 = scalar_lea.sflag [#allocation4], %s1972
        %s1974 = sand.u32 %s183, 1
        %s1975 = smul.addr %s1974, 16
        %s1976 = scalar_lea.vmem [#allocation7], %s1975
        // Predicated region
        $region57: #{tpu_custom_call.1} parent=47 // pred_check
          %p1977 = pneg %p193
        $region58: #{tpu_custom_call.1} parent=47 // pred_check_branch
          %1979 = sbr.rel (%p1977) target = $region60
        $region59: #{tpu_custom_call.1} parent=47 // pred_region
          %s1980 = smul.u32 4, %s23
          %s1982 = ssub.s32 256, 256
          %1983 = vsyncadd %s1973, %s1982
          %s1984 = smul.addr %s1980, 64
          %s1985 = scalar_lea.hbm %s7, %s1984
          %s1986 = sshll.u32 %s1976, 4
          %s1987 = int_to_ptr.vmem [resolvable:$true] %s1986
          %1992 = dma.vmem_to_hbm [thread:$0]  %s1987, 256, %s1985, %s1973, 64, 64, 4
        $region60: #{tpu_custom_call.1} parent=47 // pred_fallthru
          _
      $region48: #{tpu_custom_call.1} parent=5 // pred_fallthru
        _
      %p1993 = scmp.le.s32.totalorder 2, %s18
      // Predicated region
      $region61: #{tpu_custom_call.1} parent=5 // pred_check
        %p1994 = pneg %p1993
      $region62: #{tpu_custom_call.1} parent=5 // pred_check_branch
        %1996 = sbr.rel (%p1994) target = $region64
      $region63: #{tpu_custom_call.1} parent=5 // pred_region
        %s1997 = ssub.s32 %s18, 2
        // Predicated region
        $region65: #{tpu_custom_call.1} parent=63 // pred_check
          %p1998 = pneg %p199
        $region66: #{tpu_custom_call.1} parent=63 // pred_check_branch
          %2000 = sbr.rel (%p1998) target = $region68
        $region67: #{tpu_custom_call.1} parent=63 // pred_region
          %s2001 = sand.u32 %s184, 1
          %s2002 = scalar_lea.sflag [#allocation4], %s2001
          %s2003 = sand.u32 %s184, 1
          %s2004 = smul.addr %s2003, 16
          %s2005 = scalar_lea.vmem [#allocation7], %s2004
          %2006 = dma.done %s2002, 256
        $region68: #{tpu_custom_call.1} parent=63 // pred_fallthru
          _
      $region64: #{tpu_custom_call.1} parent=5 // pred_fallthru
        _
    $region6: #{tpu_custom_call.1} parent=1 // loop_footer
      %s22 = sadd.s32 1, %s18
    $region7: #{tpu_custom_call.1} parent=1 // loop_footer_branch
      %17 = sbr.rel target = $region3
    $region8: #{tpu_custom_call.1} parent=1 // loop_exit
      _
    %2007 = vsyncpa [#allocation3], 1
    %s2008 = scalar_lea.sflag [#allocation3], 1
    %2009 = vsyncpa %s2008, 1
    %2010 = vsyncpa [#allocation6], 1
    %2011 = vsyncpa [#allocation4], 1
    %s2012 = scalar_lea.sflag [#allocation4], 1
    %2013 = vsyncpa %s2012, 1

</llo_original>
